<compile_context>
chip_gen: v7x
topology: tpu7x:2x2x1
jax: 0.10.0
libtpu: 0.0.40
codegen_flags: <defaults>
</compile_context>

<pallas_src>
import numpy as np
import jax
import jax.numpy as jnp
from jax.experimental import pallas as pl
from jax.experimental.pallas import tpu as pltpu

LASER_LEN = 180
STATE_DIM = LASER_LEN + 5          # 185
ACTION_DIM = 2
NEG_SLOPE = 0.01                   # F.leaky_relu default


def _conv_out(L, k, s):
    return (L - k) // s + 1


L1 = _conv_out(LASER_LEN, 8, 4)    # 44
L2 = _conv_out(L1, 8, 4)           # 10
L3 = _conv_out(L2, 4, 2)           # 4
FLAT = 4 * L3                      # 16 (torch channel-major flatten)
C1 = 4 * L1                        # 176 live conv1 lanes
C2 = 8 * L2                        # 80  live conv2 lanes
assert FLAT + 10 + 10 == 36


def _rup(x, m):
    return (x + m - 1) // m * m


# lane-padded widths (multiples of 128)
XP = _rup(STATE_DIM, 128)          # 256  state lanes (zero-padded)
C1P = _rup(C1 + 10, 128)           # 256  conv1 + 10 goal/act carry lanes
C2P = _rup(C2 + 10, 128)           # 128  conv2 + 10 goal/act carry lanes
MIXP = 128                         # [flat16 | goal10 | act10 | 0...]
H1P = _rup(400, 128)               # 512
H2P = _rup(300, 128)               # 384
OUTP = 128                         # action lanes padded for unmasked stores


# ----------------------------- Pallas kernel --------------------------------
def actor_kernel(x_ref,
                 wc1_ref, b1_ref, wc2_ref, b2_ref, wc3_ref, b3_ref,
                 w1_ref, b4_ref, w2_ref, b5_ref, w3_ref, b6_ref,
                 out_ref):
    # bf16 operands on the MXU, f32 accumulation; bias + leaky-relu in f32,
    # then a single cast back to bf16 per layer (halves vreg/VMEM pressure).
    def dot(a, w_ref):
        return jnp.dot(a, w_ref[...], preferred_element_type=jnp.float32)

    def act(acc, b_ref):
        v = acc + b_ref[...]
        return jnp.where(v > 0, v, NEG_SLOPE * v).astype(jnp.bfloat16)

    x = x_ref[...]                                   # (Bt, 256) bf16
    h = act(dot(x, wc1_ref), b1_ref)                 # (Bt, 256) conv1 + carries
    h = act(dot(h, wc2_ref), b2_ref)                 # (Bt, 128) conv2 + carries
    h = act(dot(h, wc3_ref), b3_ref)                 # (Bt, 128) conv3|goal|act
    h = act(dot(h, w1_ref), b4_ref)                  # (Bt, 512) layer_1
    h = act(dot(h, w2_ref), b5_ref)                  # (Bt, 384) layer_2
    out_ref[...] = jnp.tanh(dot(h, w3_ref) + b6_ref[...]).astype(out_ref.dtype)


# ------------------------- parameter setup (glue) ----------------------------
def init_params(key, action_dim=ACTION_DIM):
    """Deterministic synthetic parameters with exact PyTorch module shapes."""
    def uniform(k, shape, fan_in):
        b = 1.0 / np.sqrt(fan_in)
        return jax.random.uniform(k, shape, jnp.float32, -b, b)

    ks = jax.random.split(key, 16)
    return dict(
        cnn1_w=uniform(ks[0], (4, 1, 8), 8),   cnn1_b=uniform(ks[1], (4,), 8),
        cnn2_w=uniform(ks[2], (8, 4, 8), 32),  cnn2_b=uniform(ks[3], (8,), 32),
        cnn3_w=uniform(ks[4], (4, 8, 4), 32),  cnn3_b=uniform(ks[5], (4,), 32),
        goal_w=uniform(ks[6], (10, 3), 3),     goal_b=uniform(ks[7], (10,), 3),
        act_w=uniform(ks[8], (10, 2), 2),      act_b=uniform(ks[9], (10,), 2),
        l1_w=uniform(ks[10], (400, 36), 36),   l1_b=uniform(ks[11], (400,), 36),
        l2_w=uniform(ks[12], (300, 400), 400), l2_b=uniform(ks[13], (300,), 400),
        l3_w=uniform(ks[14], (action_dim, 300), 300),
        l3_b=uniform(ks[15], (action_dim,), 300),
    )


def conv1d_as_dense(w, L_in, stride):
    """Dense (C_in*L_in, C_out*L_out) matrix exactly reproducing nn.Conv1d
    (no padding), channel-major flatten on both sides."""
    w = np.asarray(w, np.float32)
    C_out, C_in, K = w.shape
    L_out = (L_in - K) // stride + 1
    dense = np.zeros((C_in * L_in, C_out * L_out), dtype=np.float32)
    for co in range(C_out):
        for ci in range(C_in):
            for t in range(L_out):
                s0 = ci * L_in + stride * t
                dense[s0:s0 + K, co * L_out + t] = w[co, ci, :]
    return dense


def prepare_kernel_params(p):
    """Fold slicing / concat / embeddings / padding into zero-padded matrices."""
    def pad2(m, rows, cols):
        m = np.asarray(m, np.float32)
        out = np.zeros((rows, cols), np.float32)
        out[:m.shape[0], :m.shape[1]] = m
        return out

    def row(v, cols):
        v = np.asarray(v, np.float32)
        out = np.zeros((1, cols), np.float32)
        out[0, :v.shape[0]] = v
        return jnp.asarray(out)

    bf = lambda m: jnp.asarray(m, jnp.bfloat16)

    # conv1 (Toeplitz) + carry lanes for the 5 goal/act scalars g_j:
    #   lane C1+j <- +g_j,  lane C1+5+j <- -g_j   (bias is zero there)
    wc1 = pad2(conv1d_as_dense(p['cnn1_w'], LASER_LEN, 4), XP, C1P)
    for j in range(5):
        wc1[LASER_LEN + j, C1 + j] = 1.0
        wc1[LASER_LEN + j, C1 + 5 + j] = -1.0

    # conv2 (Toeplitz) + identity carry of the leaky-relu'd +/-g lanes
    wc2 = pad2(conv1d_as_dense(p['cnn2_w'], L1, 4), C1P, C2P)
    for j in range(10):
        wc2[C1 + j, C2 + j] = 1.0

    # conv3 (Toeplitz) + goal/act embeddings read from the carried lanes via
    #   lrelu(lrelu(g)) - lrelu(lrelu(-g)) == (1 + slope^2) * g   (exact)
    wc3 = pad2(conv1d_as_dense(p['cnn3_w'], L2, 2), MIXP, MIXP)
    inv = 1.0 / (1.0 + NEG_SLOPE ** 2)
    gw = np.asarray(p['goal_w'], np.float32)     # (10, 3)
    aw = np.asarray(p['act_w'], np.float32)      # (10, 2)
    for j in range(3):                            # goal -> lanes 16..25
        wc3[C2 + j,     FLAT:FLAT + 10] += inv * gw[:, j]
        wc3[C2 + 5 + j, FLAT:FLAT + 10] -= inv * gw[:, j]
    for j in range(2):                            # action -> lanes 26..35
        wc3[C2 + 3 + j, FLAT + 10:FLAT + 20] += inv * aw[:, j]
        wc3[C2 + 8 + j, FLAT + 10:FLAT + 20] -= inv * aw[:, j]

    b3 = np.zeros((1, MIXP), np.float32)
    b3[0, :FLAT] = np.repeat(np.asarray(p['cnn3_b'], np.float32), L3)
    b3[0, FLAT:FLAT + 10] = np.asarray(p['goal_b'], np.float32)
    b3[0, FLAT + 10:FLAT + 20] = np.asarray(p['act_b'], np.float32)

    # fully connected stack, lane-padded (rows beyond the live width are zero)
    w1 = pad2(np.asarray(p['l1_w'], np.float32).T, MIXP, H1P)   # rows 0:36 live
    w2 = pad2(np.asarray(p['l2_w'], np.float32).T, H1P, H2P)
    w3 = pad2(np.asarray(p['l3_w'], np.float32).T, H2P, OUTP)

    return [bf(wc1), row(np.repeat(np.asarray(p['cnn1_b'], np.float32), L1), C1P),
            bf(wc2), row(np.repeat(np.asarray(p['cnn2_b'], np.float32), L2), C2P),
            bf(wc3), jnp.asarray(b3),
            bf(w1), row(p['l1_b'], H1P),
            bf(w2), row(p['l2_b'], H2P),
            bf(w3), row(p['l3_b'], OUTP)]


# ------------------------------- wrapper -------------------------------------
def _pick_btile(B):
    """Batch tile: big tiles for training batches (amortize ~0.35us/step), but
    guarantee >= 2 grid steps when B allows so both v7x TensorCores get work.
    Always a multiple of 16 (bf16 sublane packing)."""
    if B <= 16:
        return _rup(max(B, 1), 16)
    preferred = 1024
    half = _rup((B + 1) // 2, 16)
    return min(preferred, half)


def actor_forward(s, kparams, action_dim=ACTION_DIM):
    if s.ndim == 1:                 # matches the PyTorch unsqueeze(0) branch
        s = s[None, :]
    B = s.shape[0]
    s = s.astype(jnp.bfloat16)      # state only ever feeds bf16 MXU dots

    b_tile = _pick_btile(B)
    Bp = _rup(B, b_tile)
    # pad batch to a tile multiple and lanes 185 -> 256 (zeros; weight rows
    # beyond 185 are zero, so this is semantically neutral)
    s = jnp.pad(s, ((0, Bp - B), (0, XP - s.shape[1])))
    grid = (Bp // b_tile,)

    state_spec = pl.BlockSpec((b_tile, XP), lambda i: (i, 0))
    const_spec = lambda w: pl.BlockSpec(tuple(w.shape), lambda i: (0, 0))
    out_spec = pl.BlockSpec((b_tile, OUTP), lambda i: (i, 0))

    flops = 2 * Bp * (XP * C1P + C1P * C2P + C2P * MIXP
                      + MIXP * H1P + H1P * H2P + H2P * OUTP)
    param_bytes = sum(int(np.prod(w.shape)) * w.dtype.itemsize for w in kparams)
    cost = pl.CostEstimate(
        flops=int(flops),
        transcendentals=int(Bp * OUTP),
        bytes_accessed=int(param_bytes + Bp * (XP + OUTP) * 2))

    out = pl.pallas_call(
        actor_kernel,
        out_shape=jax.ShapeDtypeStruct((Bp, OUTP), jnp.bfloat16),
        grid=grid,
        in_specs=[state_spec] + [const_spec(w) for w in kparams],
        out_specs=out_spec,
        compiler_params=pltpu.CompilerParams(
            dimension_semantics=("parallel",)),
        cost_estimate=cost,
    )(s, *kparams)
    return out[:B, :action_dim].astype(jnp.float32)


# ------------------------- pure-JAX f32 reference ----------------------------
def _conv1d_ref(x, w, b, stride):
    """Plain nn.Conv1d (no padding): x (B,Cin,L), w (Cout,Cin,K), b (Cout,)."""
    K = w.shape[2]
    L_out = (x.shape[2] - K) // stride + 1
    cols = [jnp.einsum('bck,ock->bo', x[:, :, t * stride:t * stride + K], w)
            for t in range(L_out)]
    return jnp.stack(cols, axis=-1) + b[None, :, None]


def actor_reference(s, p):
    if s.ndim == 1:
        s = s[None, :]
    lr = lambda v: jnp.where(v > 0, v, NEG_SLOPE * v)
    laser = s[:, :LASER_LEN][:, None, :]
    goal = s[:, LASER_LEN:LASER_LEN + 3]
    act = s[:, LASER_LEN + 3:]
    l = lr(_conv1d_ref(laser, p['cnn1_w'], p['cnn1_b'], 4))
    l = lr(_conv1d_ref(l, p['cnn2_w'], p['cnn2_b'], 4))
    l = lr(_conv1d_ref(l, p['cnn3_w'], p['cnn3_b'], 2))
    l = l.reshape(l.shape[0], -1)
    g = lr(goal @ p['goal_w'].T + p['goal_b'])
    a = lr(act @ p['act_w'].T + p['act_b'])
    h = jnp.concatenate([l, g, a], axis=-1)
    h = lr(h @ p['l1_w'].T + p['l1_b'])
    h = lr(h @ p['l2_w'].T + p['l2_b'])
    return jnp.tanh(h @ p['l3_w'].T + p['l3_b'])


if __name__ == "__main__":
    key = jax.random.PRNGKey(0)
    pkey, skey = jax.random.split(key)

    params = init_params(pkey, ACTION_DIM)
    kparams = prepare_kernel_params(params)

    B = 2
    s = jax.random.uniform(skey, (B, STATE_DIM), jnp.float32, -1.0, 1.0)

    fwd = jax.jit(lambda x: actor_forward(x, kparams, ACTION_DIM))
    out = fwd(s)
    jax.block_until_ready(out)

    assert out.shape == (B, ACTION_DIM), out.shape
    assert bool(jnp.all(jnp.isfinite(out)))
    assert bool(jnp.all(jnp.abs(out) <= 1.0))        # tanh bound

    ref = actor_reference(s, params)                 # f32 reference (bf16 tol)
    err = float(jnp.max(jnp.abs(out - ref)))
    assert err < 6e-2, f"max abs err vs reference: {err}"
    print("KERNEL_OK")
</pallas_src>

<mosaic_0001>
module attributes {stable_mosaic.version = 11 : i64} {
  func.func @actor_kernel(%arg0: i32, %arg1: memref<16x256xbf16, #tpu.memory_space<vmem>>, %arg2: memref<256x256xbf16, #tpu.memory_space<vmem>>, %arg3: memref<1x256xf32, #tpu.memory_space<vmem>>, %arg4: memref<256x128xbf16, #tpu.memory_space<vmem>>, %arg5: memref<1x128xf32, #tpu.memory_space<vmem>>, %arg6: memref<128x128xbf16, #tpu.memory_space<vmem>>, %arg7: memref<1x128xf32, #tpu.memory_space<vmem>>, %arg8: memref<128x512xbf16, #tpu.memory_space<vmem>>, %arg9: memref<1x512xf32, #tpu.memory_space<vmem>>, %arg10: memref<512x384xbf16, #tpu.memory_space<vmem>>, %arg11: memref<1x384xf32, #tpu.memory_space<vmem>>, %arg12: memref<384x128xbf16, #tpu.memory_space<vmem>>, %arg13: memref<1x128xf32, #tpu.memory_space<vmem>>, %arg14: memref<16x128xbf16, #tpu.memory_space<vmem>>) attributes {dimension_semantics = [#tpu.dimension_semantics<parallel>], iteration_bounds = array<i64: 1>, scalar_prefetch = 0 : i64, scratch_operands = 0 : i64, tpu.core_type = #tpu.core_type<tc>, window_params = [{transform_indices = @transform_0, window_bounds = array<i64: 16, 256>}, {pipeline_mode = #tpu.pipeline_mode<synchronous>, transform_indices = @transform_1, window_bounds = array<i64: 256, 256>}, {pipeline_mode = #tpu.pipeline_mode<synchronous>, transform_indices = @transform_2, window_bounds = array<i64: 1, 256>}, {pipeline_mode = #tpu.pipeline_mode<synchronous>, transform_indices = @transform_3, window_bounds = array<i64: 256, 128>}, {pipeline_mode = #tpu.pipeline_mode<synchronous>, transform_indices = @transform_4, window_bounds = array<i64: 1, 128>}, {pipeline_mode = #tpu.pipeline_mode<synchronous>, transform_indices = @transform_5, window_bounds = array<i64: 128, 128>}, {pipeline_mode = #tpu.pipeline_mode<synchronous>, transform_indices = @transform_6, window_bounds = array<i64: 1, 128>}, {pipeline_mode = #tpu.pipeline_mode<synchronous>, transform_indices = @transform_7, window_bounds = array<i64: 128, 512>}, {pipeline_mode = #tpu.pipeline_mode<synchronous>, transform_indices = @transform_8, window_bounds = array<i64: 1, 512>}, {pipeline_mode = #tpu.pipeline_mode<synchronous>, transform_indices = @transform_9, window_bounds = array<i64: 512, 384>}, {pipeline_mode = #tpu.pipeline_mode<synchronous>, transform_indices = @transform_10, window_bounds = array<i64: 1, 384>}, {pipeline_mode = #tpu.pipeline_mode<synchronous>, transform_indices = @transform_11, window_bounds = array<i64: 384, 128>}, {pipeline_mode = #tpu.pipeline_mode<synchronous>, transform_indices = @transform_12, window_bounds = array<i64: 1, 128>}, {transform_indices = @transform_13, window_bounds = array<i64: 16, 128>}]} {
    %c0 = arith.constant 0 : index
    %c0_0 = arith.constant 0 : index
    %0 = vector.load %arg1[%c0, %c0_0] : memref<16x256xbf16, #tpu.memory_space<vmem>>, vector<16x256xbf16>
    %c0_1 = arith.constant 0 : index
    %c0_2 = arith.constant 0 : index
    %1 = vector.load %arg2[%c0_1, %c0_2] : memref<256x256xbf16, #tpu.memory_space<vmem>>, vector<256x256xbf16>
    %cst = arith.constant dense<0.000000e+00> : vector<16x256xf32>
    %2 = tpu.matmul %0, %1, %cst {dimension_numbers = #tpu.dot_dimension_numbers<[1], [0], [0], [1], [0, 0, 1, 1], [], []>} : vector<16x256xbf16>, vector<256x256xbf16>, vector<16x256xf32> -> vector<16x256xf32>
    %c0_3 = arith.constant 0 : index
    %c0_4 = arith.constant 0 : index
    %3 = vector.load %arg3[%c0_3, %c0_4] : memref<1x256xf32, #tpu.memory_space<vmem>>, vector<1x256xf32>
    %4 = vector.broadcast %3 : vector<1x256xf32> to vector<16x256xf32>
    %5 = arith.addf %2, %4 : vector<16x256xf32>
    %cst_5 = arith.constant 0.000000e+00 : f32
    %6 = vector.broadcast %cst_5 : f32 to vector<16x256xf32>
    %7 = arith.cmpf ogt, %5, %6 : vector<16x256xf32>
    %cst_6 = arith.constant 0.00999999977 : f32
    %8 = vector.broadcast %cst_6 : f32 to vector<16x256xf32>
    %9 = arith.mulf %8, %5 : vector<16x256xf32>
    %10 = arith.select %7, %5, %9 : vector<16x256xi1>, vector<16x256xf32>
    %11 = arith.truncf %10 : vector<16x256xf32> to vector<16x256xbf16>
    %c0_7 = arith.constant 0 : index
    %c0_8 = arith.constant 0 : index
    %12 = vector.load %arg4[%c0_7, %c0_8] : memref<256x128xbf16, #tpu.memory_space<vmem>>, vector<256x128xbf16>
    %cst_9 = arith.constant dense<0.000000e+00> : vector<16x128xf32>
    %13 = tpu.matmul %11, %12, %cst_9 {dimension_numbers = #tpu.dot_dimension_numbers<[1], [0], [0], [1], [0, 0, 1, 1], [], []>} : vector<16x256xbf16>, vector<256x128xbf16>, vector<16x128xf32> -> vector<16x128xf32>
    %c0_10 = arith.constant 0 : index
    %c0_11 = arith.constant 0 : index
    %14 = vector.load %arg5[%c0_10, %c0_11] : memref<1x128xf32, #tpu.memory_space<vmem>>, vector<1x128xf32>
    %15 = vector.broadcast %14 : vector<1x128xf32> to vector<16x128xf32>
    %16 = arith.addf %13, %15 : vector<16x128xf32>
    %cst_12 = arith.constant 0.000000e+00 : f32
    %17 = vector.broadcast %cst_12 : f32 to vector<16x128xf32>
    %18 = arith.cmpf ogt, %16, %17 : vector<16x128xf32>
    %cst_13 = arith.constant 0.00999999977 : f32
    %19 = vector.broadcast %cst_13 : f32 to vector<16x128xf32>
    %20 = arith.mulf %19, %16 : vector<16x128xf32>
    %21 = arith.select %18, %16, %20 : vector<16x128xi1>, vector<16x128xf32>
    %22 = arith.truncf %21 : vector<16x128xf32> to vector<16x128xbf16>
    %c0_14 = arith.constant 0 : index
    %c0_15 = arith.constant 0 : index
    %23 = vector.load %arg6[%c0_14, %c0_15] : memref<128x128xbf16, #tpu.memory_space<vmem>>, vector<128x128xbf16>
    %cst_16 = arith.constant dense<0.000000e+00> : vector<16x128xf32>
    %24 = tpu.matmul %22, %23, %cst_16 {dimension_numbers = #tpu.dot_dimension_numbers<[1], [0], [0], [1], [0, 0, 1, 1], [], []>} : vector<16x128xbf16>, vector<128x128xbf16>, vector<16x128xf32> -> vector<16x128xf32>
    %c0_17 = arith.constant 0 : index
    %c0_18 = arith.constant 0 : index
    %25 = vector.load %arg7[%c0_17, %c0_18] : memref<1x128xf32, #tpu.memory_space<vmem>>, vector<1x128xf32>
    %26 = vector.broadcast %25 : vector<1x128xf32> to vector<16x128xf32>
    %27 = arith.addf %24, %26 : vector<16x128xf32>
    %cst_19 = arith.constant 0.000000e+00 : f32
    %28 = vector.broadcast %cst_19 : f32 to vector<16x128xf32>
    %29 = arith.cmpf ogt, %27, %28 : vector<16x128xf32>
    %cst_20 = arith.constant 0.00999999977 : f32
    %30 = vector.broadcast %cst_20 : f32 to vector<16x128xf32>
    %31 = arith.mulf %30, %27 : vector<16x128xf32>
    %32 = arith.select %29, %27, %31 : vector<16x128xi1>, vector<16x128xf32>
    %33 = arith.truncf %32 : vector<16x128xf32> to vector<16x128xbf16>
    %c0_21 = arith.constant 0 : index
    %c0_22 = arith.constant 0 : index
    %34 = vector.load %arg8[%c0_21, %c0_22] : memref<128x512xbf16, #tpu.memory_space<vmem>>, vector<128x512xbf16>
    %cst_23 = arith.constant dense<0.000000e+00> : vector<16x512xf32>
    %35 = tpu.matmul %33, %34, %cst_23 {dimension_numbers = #tpu.dot_dimension_numbers<[1], [0], [0], [1], [0, 0, 1, 1], [], []>} : vector<16x128xbf16>, vector<128x512xbf16>, vector<16x512xf32> -> vector<16x512xf32>
    %c0_24 = arith.constant 0 : index
    %c0_25 = arith.constant 0 : index
    %36 = vector.load %arg9[%c0_24, %c0_25] : memref<1x512xf32, #tpu.memory_space<vmem>>, vector<1x512xf32>
    %37 = vector.broadcast %36 : vector<1x512xf32> to vector<16x512xf32>
    %38 = arith.addf %35, %37 : vector<16x512xf32>
    %cst_26 = arith.constant 0.000000e+00 : f32
    %39 = vector.broadcast %cst_26 : f32 to vector<16x512xf32>
    %40 = arith.cmpf ogt, %38, %39 : vector<16x512xf32>
    %cst_27 = arith.constant 0.00999999977 : f32
    %41 = vector.broadcast %cst_27 : f32 to vector<16x512xf32>
    %42 = arith.mulf %41, %38 : vector<16x512xf32>
    %43 = arith.select %40, %38, %42 : vector<16x512xi1>, vector<16x512xf32>
    %44 = arith.truncf %43 : vector<16x512xf32> to vector<16x512xbf16>
    %c0_28 = arith.constant 0 : index
    %c0_29 = arith.constant 0 : index
    %45 = vector.load %arg10[%c0_28, %c0_29] : memref<512x384xbf16, #tpu.memory_space<vmem>>, vector<512x384xbf16>
    %cst_30 = arith.constant dense<0.000000e+00> : vector<16x384xf32>
    %46 = tpu.matmul %44, %45, %cst_30 {dimension_numbers = #tpu.dot_dimension_numbers<[1], [0], [0], [1], [0, 0, 1, 1], [], []>} : vector<16x512xbf16>, vector<512x384xbf16>, vector<16x384xf32> -> vector<16x384xf32>
    %c0_31 = arith.constant 0 : index
    %c0_32 = arith.constant 0 : index
    %47 = vector.load %arg11[%c0_31, %c0_32] : memref<1x384xf32, #tpu.memory_space<vmem>>, vector<1x384xf32>
    %48 = vector.broadcast %47 : vector<1x384xf32> to vector<16x384xf32>
    %49 = arith.addf %46, %48 : vector<16x384xf32>
    %cst_33 = arith.constant 0.000000e+00 : f32
    %50 = vector.broadcast %cst_33 : f32 to vector<16x384xf32>
    %51 = arith.cmpf ogt, %49, %50 : vector<16x384xf32>
    %cst_34 = arith.constant 0.00999999977 : f32
    %52 = vector.broadcast %cst_34 : f32 to vector<16x384xf32>
    %53 = arith.mulf %52, %49 : vector<16x384xf32>
    %54 = arith.select %51, %49, %53 : vector<16x384xi1>, vector<16x384xf32>
    %55 = arith.truncf %54 : vector<16x384xf32> to vector<16x384xbf16>
    %c0_35 = arith.constant 0 : index
    %c0_36 = arith.constant 0 : index
    %56 = vector.load %arg12[%c0_35, %c0_36] : memref<384x128xbf16, #tpu.memory_space<vmem>>, vector<384x128xbf16>
    %cst_37 = arith.constant dense<0.000000e+00> : vector<16x128xf32>
    %57 = tpu.matmul %55, %56, %cst_37 {dimension_numbers = #tpu.dot_dimension_numbers<[1], [0], [0], [1], [0, 0, 1, 1], [], []>} : vector<16x384xbf16>, vector<384x128xbf16>, vector<16x128xf32> -> vector<16x128xf32>
    %c0_38 = arith.constant 0 : index
    %c0_39 = arith.constant 0 : index
    %58 = vector.load %arg13[%c0_38, %c0_39] : memref<1x128xf32, #tpu.memory_space<vmem>>, vector<1x128xf32>
    %59 = vector.broadcast %58 : vector<1x128xf32> to vector<16x128xf32>
    %60 = arith.addf %57, %59 : vector<16x128xf32>
    %61 = math.tanh %60 : vector<16x128xf32>
    %62 = arith.truncf %61 : vector<16x128xf32> to vector<16x128xbf16>
    %c0_40 = arith.constant 0 : index
    %c0_41 = arith.constant 0 : index
    %63 = vector.load %arg14[%c0_40, %c0_41] : memref<16x128xbf16, #tpu.memory_space<vmem>>, vector<16x128xbf16>
    tpu.vector_store %arg14[%c0_40, %c0_41], %62 {strides = array<i32>} : memref<16x128xbf16, #tpu.memory_space<vmem>>, vector<16x128xbf16>,
    return
  }
  func.func @transform_0(%arg0: i32) -> (i32, i32) {
    %c0_i32 = arith.constant 0 : i32
    %c0_i32_0 = arith.constant 0 : i32
    return %arg0, %c0_i32 : i32, i32
  }
  func.func @transform_1(%arg0: i32) -> (i32, i32) {
    %c0_i32 = arith.constant 0 : i32
    %c0_i32_0 = arith.constant 0 : i32
    %c0_i32_1 = arith.constant 0 : i32
    return %c0_i32, %c0_i32_0 : i32, i32
  }
  func.func @transform_2(%arg0: i32) -> (i32, i32) {
    %c0_i32 = arith.constant 0 : i32
    %c0_i32_0 = arith.constant 0 : i32
    %c0_i32_1 = arith.constant 0 : i32
    return %c0_i32, %c0_i32_0 : i32, i32
  }
  func.func @transform_3(%arg0: i32) -> (i32, i32) {
    %c0_i32 = arith.constant 0 : i32
    %c0_i32_0 = arith.constant 0 : i32
    %c0_i32_1 = arith.constant 0 : i32
    return %c0_i32, %c0_i32_0 : i32, i32
  }
  func.func @transform_4(%arg0: i32) -> (i32, i32) {
    %c0_i32 = arith.constant 0 : i32
    %c0_i32_0 = arith.constant 0 : i32
    %c0_i32_1 = arith.constant 0 : i32
    return %c0_i32, %c0_i32_0 : i32, i32
  }
  func.func @transform_5(%arg0: i32) -> (i32, i32) {
    %c0_i32 = arith.constant 0 : i32
    %c0_i32_0 = arith.constant 0 : i32
    %c0_i32_1 = arith.constant 0 : i32
    return %c0_i32, %c0_i32_0 : i32, i32
  }
  func.func @transform_6(%arg0: i32) -> (i32, i32) {
    %c0_i32 = arith.constant 0 : i32
    %c0_i32_0 = arith.constant 0 : i32
    %c0_i32_1 = arith.constant 0 : i32
    return %c0_i32, %c0_i32_0 : i32, i32
  }
  func.func @transform_7(%arg0: i32) -> (i32, i32) {
    %c0_i32 = arith.constant 0 : i32
    %c0_i32_0 = arith.constant 0 : i32
    %c0_i32_1 = arith.constant 0 : i32
    return %c0_i32, %c0_i32_0 : i32, i32
  }
  func.func @transform_8(%arg0: i32) -> (i32, i32) {
    %c0_i32 = arith.constant 0 : i32
    %c0_i32_0 = arith.constant 0 : i32
    %c0_i32_1 = arith.constant 0 : i32
    return %c0_i32, %c0_i32_0 : i32, i32
  }
  func.func @transform_9(%arg0: i32) -> (i32, i32) {
    %c0_i32 = arith.constant 0 : i32
    %c0_i32_0 = arith.constant 0 : i32
    %c0_i32_1 = arith.constant 0 : i32
    return %c0_i32, %c0_i32_0 : i32, i32
  }
  func.func @transform_10(%arg0: i32) -> (i32, i32) {
    %c0_i32 = arith.constant 0 : i32
    %c0_i32_0 = arith.constant 0 : i32
    %c0_i32_1 = arith.constant 0 : i32
    return %c0_i32, %c0_i32_0 : i32, i32
  }
  func.func @transform_11(%arg0: i32) -> (i32, i32) {
    %c0_i32 = arith.constant 0 : i32
    %c0_i32_0 = arith.constant 0 : i32
    %c0_i32_1 = arith.constant 0 : i32
    return %c0_i32, %c0_i32_0 : i32, i32
  }
  func.func @transform_12(%arg0: i32) -> (i32, i32) {
    %c0_i32 = arith.constant 0 : i32
    %c0_i32_0 = arith.constant 0 : i32
    %c0_i32_1 = arith.constant 0 : i32
    return %c0_i32, %c0_i32_0 : i32, i32
  }
  func.func @transform_13(%arg0: i32) -> (i32, i32) {
    %c0_i32 = arith.constant 0 : i32
    %c0_i32_0 = arith.constant 0 : i32
    return %arg0, %c0_i32 : i32, i32
  }
}

</mosaic_0001>

<llo_original>
// kernel: _lambda_.1
$region0: #{_lambda_.1}
  #allocation0 [shape = 'u32[]', space=smem, size = 0x4, offset = 0x4, fixed_abs, tag = 'smem constant byte address 0x4 - core index']
  #allocation1 [shape = 'u32[144,128]{1,0:T(1,128)}', space=vmem, size = 0x12000, scoped, tag = 'internal scratch']
  %s0 = inlined_call_operand.vmem [shape: bf16[16,256], index: 0, kind: input, shape index: {}]
  %s1 = inlined_call_operand.vmem [shape: bf16[256,256], index: 1, kind: input, shape index: {}]
  %s2 = inlined_call_operand.vmem [shape: f32[1,256], index: 2, kind: input, shape index: {}]
  %s3 = inlined_call_operand.vmem [shape: bf16[256,128], index: 3, kind: input, shape index: {}]
  %s4 = inlined_call_operand.vmem [shape: f32[1,128], index: 4, kind: input, shape index: {}]
  %s5 = inlined_call_operand.vmem [shape: bf16[128,128], index: 5, kind: input, shape index: {}]
  %s6 = inlined_call_operand.vmem [shape: f32[1,128], index: 6, kind: input, shape index: {}]
  %s7 = inlined_call_operand.vmem [shape: bf16[128,512], index: 7, kind: input, shape index: {}]
  %s8 = inlined_call_operand.vmem [shape: f32[1,512], index: 8, kind: input, shape index: {}]
  %s9 = inlined_call_operand.vmem [shape: bf16[512,384], index: 9, kind: input, shape index: {}]
  %s10 = inlined_call_operand.vmem [shape: f32[1,384], index: 10, kind: input, shape index: {}]
  %s11 = inlined_call_operand.vmem [shape: bf16[384,128], index: 11, kind: input, shape index: {}]
  %s12 = inlined_call_operand.vmem [shape: f32[1,128], index: 12, kind: input, shape index: {}]
  %s13 = inlined_call_operand.vmem [shape: bf16[16,128], index: 13, kind: output, shape index: {}]
  %s14 = sld [smem:[#allocation0]]
  $region62: #{_lambda_.1} parent=0
    _
  %s16 = ssub.s32 1, %s14
  %s17 = scalar_select 0, %s16, %s14
  // Predicated region
  $region2: #{_lambda_.1} parent=0 // pred_check
    _
  $region3: #{_lambda_.1} parent=0 // pred_check_branch
    %19 = sbr.rel (0) target = $region5
  $region4: #{_lambda_.1} parent=0 // pred_region
    _
  $region5: #{_lambda_.1} parent=0 // pred_fallthru
    _
  // Predicated region
  $region6: #{_lambda_.1} parent=0 // pred_check
    _
  $region7: #{_lambda_.1} parent=0 // pred_check_branch
    %21 = sbr.rel (0) target = $region9
  $region8: #{_lambda_.1} parent=0 // pred_region
    _
  $region9: #{_lambda_.1} parent=0 // pred_fallthru
    _
  // Predicated region
  $region10: #{_lambda_.1} parent=0 // pred_check
    _
  $region11: #{_lambda_.1} parent=0 // pred_check_branch
    %23 = sbr.rel (0) target = $region13
  $region12: #{_lambda_.1} parent=0 // pred_region
    _
  $region13: #{_lambda_.1} parent=0 // pred_fallthru
    _
  // Predicated region
  $region14: #{_lambda_.1} parent=0 // pred_check
    _
  $region15: #{_lambda_.1} parent=0 // pred_check_branch
    %25 = sbr.rel (0) target = $region17
  $region16: #{_lambda_.1} parent=0 // pred_region
    _
  $region17: #{_lambda_.1} parent=0 // pred_fallthru
    _
  // Predicated region
  $region18: #{_lambda_.1} parent=0 // pred_check
    _
  $region19: #{_lambda_.1} parent=0 // pred_check_branch
    %27 = sbr.rel (0) target = $region21
  $region20: #{_lambda_.1} parent=0 // pred_region
    _
  $region21: #{_lambda_.1} parent=0 // pred_fallthru
    _
  // Predicated region
  $region22: #{_lambda_.1} parent=0 // pred_check
    _
  $region23: #{_lambda_.1} parent=0 // pred_check_branch
    %29 = sbr.rel (0) target = $region25
  $region24: #{_lambda_.1} parent=0 // pred_region
    _
  $region25: #{_lambda_.1} parent=0 // pred_fallthru
    _
  // Predicated region
  $region26: #{_lambda_.1} parent=0 // pred_check
    _
  $region27: #{_lambda_.1} parent=0 // pred_check_branch
    %31 = sbr.rel (0) target = $region29
  $region28: #{_lambda_.1} parent=0 // pred_region
    _
  $region29: #{_lambda_.1} parent=0 // pred_fallthru
    _
  // Predicated region
  $region30: #{_lambda_.1} parent=0 // pred_check
    _
  $region31: #{_lambda_.1} parent=0 // pred_check_branch
    %33 = sbr.rel (0) target = $region33
  $region32: #{_lambda_.1} parent=0 // pred_region
    _
  $region33: #{_lambda_.1} parent=0 // pred_fallthru
    _
  // Predicated region
  $region34: #{_lambda_.1} parent=0 // pred_check
    _
  $region35: #{_lambda_.1} parent=0 // pred_check_branch
    %35 = sbr.rel (0) target = $region37
  $region36: #{_lambda_.1} parent=0 // pred_region
    _
  $region37: #{_lambda_.1} parent=0 // pred_fallthru
    _
  // Predicated region
  $region38: #{_lambda_.1} parent=0 // pred_check
    _
  $region39: #{_lambda_.1} parent=0 // pred_check_branch
    %37 = sbr.rel (0) target = $region41
  $region40: #{_lambda_.1} parent=0 // pred_region
    _
  $region41: #{_lambda_.1} parent=0 // pred_fallthru
    _
  // Predicated region
  $region42: #{_lambda_.1} parent=0 // pred_check
    _
  $region43: #{_lambda_.1} parent=0 // pred_check_branch
    %39 = sbr.rel (0) target = $region45
  $region44: #{_lambda_.1} parent=0 // pred_region
    _
  $region45: #{_lambda_.1} parent=0 // pred_fallthru
    _
  // Predicated region
  $region46: #{_lambda_.1} parent=0 // pred_check
    _
  $region47: #{_lambda_.1} parent=0 // pred_check_branch
    %41 = sbr.rel (0) target = $region49
  $region48: #{_lambda_.1} parent=0 // pred_region
    _
  $region49: #{_lambda_.1} parent=0 // pred_fallthru
    _
  // Predicated region
  $region50: #{_lambda_.1} parent=0 // pred_check
    _
  $region51: #{_lambda_.1} parent=0 // pred_check_branch
    %43 = sbr.rel (0) target = $region53
  $region52: #{_lambda_.1} parent=0 // pred_region
    _
  $region53: #{_lambda_.1} parent=0 // pred_fallthru
    _
  %v45 = vld [vmem:[%s0] sm:$0xff]
  %v46 = vld [vmem:[%s0 + $0x8] sm:$0xff]
  %v47 = vld [vmem:[%s1] sm:$0xff]
  %v48 = vld [vmem:[%s1 + $0x8] sm:$0xff]
  %v49 = vld [vmem:[%s1 + $0x10] sm:$0xff]
  %v50 = vld [vmem:[%s1 + $0x18] sm:$0xff]
  %v51 = vld [vmem:[%s1 + $0x20] sm:$0xff]
  %v52 = vld [vmem:[%s1 + $0x28] sm:$0xff]
  %v53 = vld [vmem:[%s1 + $0x30] sm:$0xff]
  %v54 = vld [vmem:[%s1 + $0x38] sm:$0xff]
  %v55 = vld [vmem:[%s1 + $0x40] sm:$0xff]
  %v56 = vld [vmem:[%s1 + $0x48] sm:$0xff]
  %v57 = vld [vmem:[%s1 + $0x50] sm:$0xff]
  %v58 = vld [vmem:[%s1 + $0x58] sm:$0xff]
  %v59 = vld [vmem:[%s1 + $0x60] sm:$0xff]
  %v60 = vld [vmem:[%s1 + $0x68] sm:$0xff]
  %v61 = vld [vmem:[%s1 + $0x70] sm:$0xff]
  %v62 = vld [vmem:[%s1 + $0x78] sm:$0xff]
  %v63 = vld [vmem:[%s1 + $0x80] sm:$0xff]
  %v64 = vld [vmem:[%s1 + $0x88] sm:$0xff]
  %v65 = vld [vmem:[%s1 + $0x90] sm:$0xff]
  %v66 = vld [vmem:[%s1 + $0x98] sm:$0xff]
  %v67 = vld [vmem:[%s1 + $0xa0] sm:$0xff]
  %v68 = vld [vmem:[%s1 + $0xa8] sm:$0xff]
  %v69 = vld [vmem:[%s1 + $0xb0] sm:$0xff]
  %v70 = vld [vmem:[%s1 + $0xb8] sm:$0xff]
  %v71 = vld [vmem:[%s1 + $0xc0] sm:$0xff]
  %v72 = vld [vmem:[%s1 + $0xc8] sm:$0xff]
  %v73 = vld [vmem:[%s1 + $0xd0] sm:$0xff]
  %v74 = vld [vmem:[%s1 + $0xd8] sm:$0xff]
  %v75 = vld [vmem:[%s1 + $0xe0] sm:$0xff]
  %v76 = vld [vmem:[%s1 + $0xe8] sm:$0xff]
  %v77 = vld [vmem:[%s1 + $0xf0] sm:$0xff]
  %v78 = vld [vmem:[%s1 + $0xf8] sm:$0xff]
  %v79 = vld [vmem:[%s2] sm:$0x3]
  %v81 = vlaneseq
  %v82 = vshrl.u32 %v81, 7
  %v83 = vsub.s32 0, %v82
  %v84 = vrot.slane %v79, %v83
  %v85 = vlaneseq
  %v86 = vshrl.u32 %v85, 7
  %v87 = vsub.s32 1, %v86
  %v88 = vrot.slane %v79, %v87
  %v93 = vunpack.c.l.b16 %v45
  %v94 = vunpack.c.h.b16 %v45
  %v95 = vunpack.c.l.b16 %v46
  %v96 = vunpack.c.h.b16 %v46
  %v97 = vpack.c.b16 %v95, %v93
  %v98 = vpack.c.b16 %v96, %v94
  %v133 = vunpack.c.l.b16 %v47
  %v134 = vunpack.c.h.b16 %v47
  %v135 = vunpack.c.l.b16 %v48
  %v136 = vunpack.c.h.b16 %v48
  %v137 = vunpack.c.l.b16 %v49
  %v138 = vunpack.c.h.b16 %v49
  %v139 = vunpack.c.l.b16 %v50
  %v140 = vunpack.c.h.b16 %v50
  %v141 = vunpack.c.l.b16 %v51
  %v142 = vunpack.c.h.b16 %v51
  %v143 = vunpack.c.l.b16 %v52
  %v144 = vunpack.c.h.b16 %v52
  %v145 = vunpack.c.l.b16 %v53
  %v146 = vunpack.c.h.b16 %v53
  %v147 = vunpack.c.l.b16 %v54
  %v148 = vunpack.c.h.b16 %v54
  %v149 = vunpack.c.l.b16 %v55
  %v150 = vunpack.c.h.b16 %v55
  %v151 = vunpack.c.l.b16 %v56
  %v152 = vunpack.c.h.b16 %v56
  %v153 = vunpack.c.l.b16 %v57
  %v154 = vunpack.c.h.b16 %v57
  %v155 = vunpack.c.l.b16 %v58
  %v156 = vunpack.c.h.b16 %v58
  %v157 = vunpack.c.l.b16 %v59
  %v158 = vunpack.c.h.b16 %v59
  %v159 = vunpack.c.l.b16 %v60
  %v160 = vunpack.c.h.b16 %v60
  %v161 = vunpack.c.l.b16 %v61
  %v162 = vunpack.c.h.b16 %v61
  %v163 = vunpack.c.l.b16 %v62
  %v164 = vunpack.c.h.b16 %v62
  %v165 = vunpack.c.l.b16 %v63
  %v166 = vunpack.c.h.b16 %v63
  %v167 = vunpack.c.l.b16 %v64
  %v168 = vunpack.c.h.b16 %v64
  %v169 = vunpack.c.l.b16 %v65
  %v170 = vunpack.c.h.b16 %v65
  %v171 = vunpack.c.l.b16 %v66
  %v172 = vunpack.c.h.b16 %v66
  %v173 = vunpack.c.l.b16 %v67
  %v174 = vunpack.c.h.b16 %v67
  %v175 = vunpack.c.l.b16 %v68
  %v176 = vunpack.c.h.b16 %v68
  %v177 = vunpack.c.l.b16 %v69
  %v178 = vunpack.c.h.b16 %v69
  %v179 = vunpack.c.l.b16 %v70
  %v180 = vunpack.c.h.b16 %v70
  %v181 = vunpack.c.l.b16 %v71
  %v182 = vunpack.c.h.b16 %v71
  %v183 = vunpack.c.l.b16 %v72
  %v184 = vunpack.c.h.b16 %v72
  %v185 = vunpack.c.l.b16 %v73
  %v186 = vunpack.c.h.b16 %v73
  %v187 = vunpack.c.l.b16 %v74
  %v188 = vunpack.c.h.b16 %v74
  %v189 = vunpack.c.l.b16 %v75
  %v190 = vunpack.c.h.b16 %v75
  %v191 = vunpack.c.l.b16 %v76
  %v192 = vunpack.c.h.b16 %v76
  %v193 = vunpack.c.l.b16 %v77
  %v194 = vunpack.c.h.b16 %v77
  %v195 = vunpack.c.l.b16 %v78
  %v196 = vunpack.c.h.b16 %v78
  %v197 = vpack.c.b16 %v135, %v133
  %v198 = vpack.c.b16 %v136, %v134
  %v199 = vpack.c.b16 %v139, %v137
  %v200 = vpack.c.b16 %v140, %v138
  %v201 = vpack.c.b16 %v143, %v141
  %v202 = vpack.c.b16 %v144, %v142
  %v203 = vpack.c.b16 %v147, %v145
  %v204 = vpack.c.b16 %v148, %v146
  %v205 = vpack.c.b16 %v151, %v149
  %v206 = vpack.c.b16 %v152, %v150
  %v207 = vpack.c.b16 %v155, %v153
  %v208 = vpack.c.b16 %v156, %v154
  %v209 = vpack.c.b16 %v159, %v157
  %v210 = vpack.c.b16 %v160, %v158
  %v211 = vpack.c.b16 %v163, %v161
  %v212 = vpack.c.b16 %v164, %v162
  %v213 = vpack.c.b16 %v167, %v165
  %v214 = vpack.c.b16 %v168, %v166
  %v215 = vpack.c.b16 %v171, %v169
  %v216 = vpack.c.b16 %v172, %v170
  %v217 = vpack.c.b16 %v175, %v173
  %v218 = vpack.c.b16 %v176, %v174
  %v219 = vpack.c.b16 %v179, %v177
  %v220 = vpack.c.b16 %v180, %v178
  %v221 = vpack.c.b16 %v183, %v181
  %v222 = vpack.c.b16 %v184, %v182
  %v223 = vpack.c.b16 %v187, %v185
  %v224 = vpack.c.b16 %v188, %v186
  %v225 = vpack.c.b16 %v191, %v189
  %v226 = vpack.c.b16 %v192, %v190
  %v227 = vpack.c.b16 %v195, %v193
  %v228 = vpack.c.b16 %v196, %v194
  %261 = vmatprep.subr.bf16.mxu0 %v198
  %262 = vmatpush1.bf16.msra.mxu0 %v197
  %263 = vmatprep.subr.bf16.mxu0 %v200
  %264 = vmatpush1.bf16.msra.mxu0 %v199
  %265 = vmatprep.subr.bf16.mxu0 %v202
  %266 = vmatpush1.bf16.msra.mxu0 %v201
  %267 = vmatprep.subr.bf16.mxu0 %v204
  %268 = vmatpush1.bf16.msra.mxu0 %v203
  %269 = vmatprep.subr.bf16.mxu0 %v206
  %270 = vmatpush1.bf16.msra.mxu0 %v205
  %271 = vmatprep.subr.bf16.mxu0 %v208
  %272 = vmatpush1.bf16.msra.mxu0 %v207
  %273 = vmatprep.subr.bf16.mxu0 %v210
  %274 = vmatpush1.bf16.msra.mxu0 %v209
  %275 = vmatprep.subr.bf16.mxu0 %v212
  %276 = vmatpush1.bf16.msra.mxu0 %v211
  %277 = vmatprep.subr.bf16.mxu0 %v214
  %278 = vmatpush1.bf16.msra.mxu0 %v213
  %279 = vmatprep.subr.bf16.mxu0 %v216
  %280 = vmatpush1.bf16.msra.mxu0 %v215
  %281 = vmatprep.subr.bf16.mxu0 %v218
  %282 = vmatpush1.bf16.msra.mxu0 %v217
  %283 = vmatprep.subr.bf16.mxu0 %v220
  %284 = vmatpush1.bf16.msra.mxu0 %v219
  %285 = vmatprep.subr.bf16.mxu0 %v222
  %286 = vmatpush1.bf16.msra.mxu0 %v221
  %287 = vmatprep.subr.bf16.mxu0 %v224
  %288 = vmatpush1.bf16.msra.mxu0 %v223
  %289 = vmatprep.subr.bf16.mxu0 %v226
  %290 = vmatpush1.bf16.msra.mxu0 %v225
  %291 = vmatprep.subr.bf16.mxu0 %v228
  %292 = vmatpush1.bf16.msra.mxu0 %v227
  %293 = vmatprep.mubr.bf16.mxu0 %v98
  %294 = vmatmul.mubr.bf16.gmra.mrb[0].mxu0 %v97
  %v295 = vpop.f32.mrb[0].mxu0
  %v296 = vadd.f32 %v84, %v295
  %v297 = vpop.f32.mrb[0].mxu0
  %v298 = vadd.f32 %v88, %v297
  %v299 = vpop.f32.mrb[0].mxu0
  %v300 = vadd.f32 %v84, %v299
  %v301 = vpop.f32.mrb[0].mxu0
  %v302 = vadd.f32 %v88, %v301
  %303 = vdwg.mxu0
  %vm304 = vcmp.gt.f32.partialorder %v296, 0.0
  %vm305 = vcmp.gt.f32.partialorder %v298, 0.0
  %vm306 = vcmp.gt.f32.partialorder %v300, 0.0
  %vm307 = vcmp.gt.f32.partialorder %v302, 0.0
  %v308 = vmul.f32 %v296, 0.01
  %v309 = vmul.f32 %v298, 0.01
  %v310 = vmul.f32 %v300, 0.01
  %v311 = vmul.f32 %v302, 0.01
  %v312 = vsel %vm304, %v296, %v308
  %v313 = vsel %vm305, %v298, %v309
  %v314 = vsel %vm306, %v300, %v310
  %v315 = vsel %vm307, %v302, %v311
  %v316 = vpack.c.bf16 %v314, %v312
  %v317 = vpack.c.bf16 %v315, %v313
  %v318 = vld [vmem:[%s3] sm:$0xf]
  %v319 = vld [vmem:[%s3 + $0x4] sm:$0xf]
  %v320 = vld [vmem:[%s3 + $0x8] sm:$0xf]
  %v321 = vld [vmem:[%s3 + $0xc] sm:$0xf]
  %v322 = vld [vmem:[%s3 + $0x10] sm:$0xf]
  %v323 = vld [vmem:[%s3 + $0x14] sm:$0xf]
  %v324 = vld [vmem:[%s3 + $0x18] sm:$0xf]
  %v325 = vld [vmem:[%s3 + $0x1c] sm:$0xf]
  %v326 = vld [vmem:[%s3 + $0x20] sm:$0xf]
  %v327 = vld [vmem:[%s3 + $0x24] sm:$0xf]
  %v328 = vld [vmem:[%s3 + $0x28] sm:$0xf]
  %v329 = vld [vmem:[%s3 + $0x2c] sm:$0xf]
  %v330 = vld [vmem:[%s3 + $0x30] sm:$0xf]
  %v331 = vld [vmem:[%s3 + $0x34] sm:$0xf]
  %v332 = vld [vmem:[%s3 + $0x38] sm:$0xf]
  %v333 = vld [vmem:[%s3 + $0x3c] sm:$0xf]
  %v334 = vld [vmem:[%s3 + $0x40] sm:$0xf]
  %v335 = vld [vmem:[%s3 + $0x44] sm:$0xf]
  %v336 = vld [vmem:[%s3 + $0x48] sm:$0xf]
  %v337 = vld [vmem:[%s3 + $0x4c] sm:$0xf]
  %v338 = vld [vmem:[%s3 + $0x50] sm:$0xf]
  %v339 = vld [vmem:[%s3 + $0x54] sm:$0xf]
  %v340 = vld [vmem:[%s3 + $0x58] sm:$0xf]
  %v341 = vld [vmem:[%s3 + $0x5c] sm:$0xf]
  %v342 = vld [vmem:[%s3 + $0x60] sm:$0xf]
  %v343 = vld [vmem:[%s3 + $0x64] sm:$0xf]
  %v344 = vld [vmem:[%s3 + $0x68] sm:$0xf]
  %v345 = vld [vmem:[%s3 + $0x6c] sm:$0xf]
  %v346 = vld [vmem:[%s3 + $0x70] sm:$0xf]
  %v347 = vld [vmem:[%s3 + $0x74] sm:$0xf]
  %v348 = vld [vmem:[%s3 + $0x78] sm:$0xf]
  %v349 = vld [vmem:[%s3 + $0x7c] sm:$0xf]
  %v350 = vld [vmem:[%s4] sm:$0x1]
  %v352 = vlaneseq
  %v353 = vshrl.u32 %v352, 7
  %v354 = vsub.s32 0, %v353
  %v355 = vrot.slane %v350, %v354
  %v389 = vunpack.c.l.b16 %v318
  %v390 = vunpack.c.l.b16 %v319
  %v391 = vunpack.c.l.b16 %v320
  %v392 = vunpack.c.l.b16 %v321
  %v393 = vunpack.c.l.b16 %v322
  %v394 = vunpack.c.l.b16 %v323
  %v395 = vunpack.c.l.b16 %v324
  %v396 = vunpack.c.l.b16 %v325
  %v397 = vunpack.c.l.b16 %v326
  %v398 = vunpack.c.l.b16 %v327
  %v399 = vunpack.c.l.b16 %v328
  %v400 = vunpack.c.l.b16 %v329
  %v401 = vunpack.c.l.b16 %v330
  %v402 = vunpack.c.l.b16 %v331
  %v403 = vunpack.c.l.b16 %v332
  %v404 = vunpack.c.l.b16 %v333
  %v405 = vunpack.c.l.b16 %v334
  %v406 = vunpack.c.l.b16 %v335
  %v407 = vunpack.c.l.b16 %v336
  %v408 = vunpack.c.l.b16 %v337
  %v409 = vunpack.c.l.b16 %v338
  %v410 = vunpack.c.l.b16 %v339
  %v411 = vunpack.c.l.b16 %v340
  %v412 = vunpack.c.l.b16 %v341
  %v413 = vunpack.c.l.b16 %v342
  %v414 = vunpack.c.l.b16 %v343
  %v415 = vunpack.c.l.b16 %v344
  %v416 = vunpack.c.l.b16 %v345
  %v417 = vunpack.c.l.b16 %v346
  %v418 = vunpack.c.l.b16 %v347
  %v419 = vunpack.c.l.b16 %v348
  %v420 = vunpack.c.l.b16 %v349
  %v421 = vpack.c.b16 %v390, %v389
  %v422 = vpack.c.b16 %v392, %v391
  %v423 = vpack.c.b16 %v394, %v393
  %v424 = vpack.c.b16 %v396, %v395
  %v425 = vpack.c.b16 %v398, %v397
  %v426 = vpack.c.b16 %v400, %v399
  %v427 = vpack.c.b16 %v402, %v401
  %v428 = vpack.c.b16 %v404, %v403
  %v429 = vpack.c.b16 %v406, %v405
  %v430 = vpack.c.b16 %v408, %v407
  %v431 = vpack.c.b16 %v410, %v409
  %v432 = vpack.c.b16 %v412, %v411
  %v433 = vpack.c.b16 %v414, %v413
  %v434 = vpack.c.b16 %v416, %v415
  %v435 = vpack.c.b16 %v418, %v417
  %v436 = vpack.c.b16 %v420, %v419
  %453 = vmatprep.subr.bf16.mxu0 0
  %454 = vmatpush1.bf16.msra.mxu0 %v421
  %455 = vmatprep.subr.bf16.mxu0 0
  %456 = vmatpush1.bf16.msra.mxu0 %v422
  %457 = vmatprep.subr.bf16.mxu0 0
  %458 = vmatpush1.bf16.msra.mxu0 %v423
  %459 = vmatprep.subr.bf16.mxu0 0
  %460 = vmatpush1.bf16.msra.mxu0 %v424
  %461 = vmatprep.subr.bf16.mxu0 0
  %462 = vmatpush1.bf16.msra.mxu0 %v425
  %463 = vmatprep.subr.bf16.mxu0 0
  %464 = vmatpush1.bf16.msra.mxu0 %v426
  %465 = vmatprep.subr.bf16.mxu0 0
  %466 = vmatpush1.bf16.msra.mxu0 %v427
  %467 = vmatprep.subr.bf16.mxu0 0
  %468 = vmatpush1.bf16.msra.mxu0 %v428
  %469 = vmatprep.subr.bf16.mxu0 0
  %470 = vmatpush1.bf16.msra.mxu0 %v429
  %471 = vmatprep.subr.bf16.mxu0 0
  %472 = vmatpush1.bf16.msra.mxu0 %v430
  %473 = vmatprep.subr.bf16.mxu0 0
  %474 = vmatpush1.bf16.msra.mxu0 %v431
  %475 = vmatprep.subr.bf16.mxu0 0
  %476 = vmatpush1.bf16.msra.mxu0 %v432
  %477 = vmatprep.subr.bf16.mxu0 0
  %478 = vmatpush1.bf16.msra.mxu0 %v433
  %479 = vmatprep.subr.bf16.mxu0 0
  %480 = vmatpush1.bf16.msra.mxu0 %v434
  %481 = vmatprep.subr.bf16.mxu0 0
  %482 = vmatpush1.bf16.msra.mxu0 %v435
  %483 = vmatprep.subr.bf16.mxu0 0
  %484 = vmatpush1.bf16.msra.mxu0 %v436
  %485 = vmatprep.mubr.bf16.mxu0 %v317
  %486 = vmatmul.mubr.bf16.gmra.mrb[0].mxu0 %v316
  %v487 = vpop.f32.mrb[0].mxu0
  %v488 = vadd.f32 %v355, %v487
  %v489 = vpop.f32.mrb[0].mxu0
  %v490 = vpop.f32.mrb[0].mxu0
  %v491 = vadd.f32 %v355, %v490
  %v492 = vpop.f32.mrb[0].mxu0
  %493 = vdwg.mxu0
  %vm494 = vcmp.gt.f32.partialorder %v488, 0.0
  %vm495 = vcmp.gt.f32.partialorder %v491, 0.0
  %v496 = vmul.f32 %v488, 0.01
  %v497 = vmul.f32 %v491, 0.01
  %v498 = vsel %vm494, %v488, %v496
  %v499 = vsel %vm495, %v491, %v497
  %v500 = vpack.c.bf16 %v499, %v498
  %v501 = vld [vmem:[%s5] sm:$0xf]
  %v502 = vld [vmem:[%s5 + $0x4] sm:$0xf]
  %v503 = vld [vmem:[%s5 + $0x8] sm:$0xf]
  %v504 = vld [vmem:[%s5 + $0xc] sm:$0xf]
  %v505 = vld [vmem:[%s5 + $0x10] sm:$0xf]
  %v506 = vld [vmem:[%s5 + $0x14] sm:$0xf]
  %v507 = vld [vmem:[%s5 + $0x18] sm:$0xf]
  %v508 = vld [vmem:[%s5 + $0x1c] sm:$0xf]
  %v509 = vld [vmem:[%s5 + $0x20] sm:$0xf]
  %v510 = vld [vmem:[%s5 + $0x24] sm:$0xf]
  %v511 = vld [vmem:[%s5 + $0x28] sm:$0xf]
  %v512 = vld [vmem:[%s5 + $0x2c] sm:$0xf]
  %v513 = vld [vmem:[%s5 + $0x30] sm:$0xf]
  %v514 = vld [vmem:[%s5 + $0x34] sm:$0xf]
  %v515 = vld [vmem:[%s5 + $0x38] sm:$0xf]
  %v516 = vld [vmem:[%s5 + $0x3c] sm:$0xf]
  %v517 = vld [vmem:[%s6] sm:$0x1]
  %v519 = vlaneseq
  %v520 = vshrl.u32 %v519, 7
  %v521 = vsub.s32 0, %v520
  %v522 = vrot.slane %v517, %v521
  %v540 = vunpack.c.l.b16 %v501
  %v541 = vunpack.c.l.b16 %v502
  %v542 = vunpack.c.l.b16 %v503
  %v543 = vunpack.c.l.b16 %v504
  %v544 = vunpack.c.l.b16 %v505
  %v545 = vunpack.c.l.b16 %v506
  %v546 = vunpack.c.l.b16 %v507
  %v547 = vunpack.c.l.b16 %v508
  %v548 = vunpack.c.l.b16 %v509
  %v549 = vunpack.c.l.b16 %v510
  %v550 = vunpack.c.l.b16 %v511
  %v551 = vunpack.c.l.b16 %v512
  %v552 = vunpack.c.l.b16 %v513
  %v553 = vunpack.c.l.b16 %v514
  %v554 = vunpack.c.l.b16 %v515
  %v555 = vunpack.c.l.b16 %v516
  %v556 = vpack.c.b16 %v541, %v540
  %v557 = vpack.c.b16 %v543, %v542
  %v558 = vpack.c.b16 %v545, %v544
  %v559 = vpack.c.b16 %v547, %v546
  %v560 = vpack.c.b16 %v549, %v548
  %v561 = vpack.c.b16 %v551, %v550
  %v562 = vpack.c.b16 %v553, %v552
  %v563 = vpack.c.b16 %v555, %v554
  %572 = vmatprep.subr.bf16.mxu0 0
  %573 = vmatpush1.bf16.msra.mxu0 %v556
  %574 = vmatprep.subr.bf16.mxu0 0
  %575 = vmatpush1.bf16.msra.mxu0 %v557
  %576 = vmatprep.subr.bf16.mxu0 0
  %577 = vmatpush1.bf16.msra.mxu0 %v558
  %578 = vmatprep.subr.bf16.mxu0 0
  %579 = vmatpush1.bf16.msra.mxu0 %v559
  %580 = vmatprep.subr.bf16.mxu0 0
  %581 = vmatpush1.bf16.msra.mxu0 %v560
  %582 = vmatprep.subr.bf16.mxu0 0
  %583 = vmatpush1.bf16.msra.mxu0 %v561
  %584 = vmatprep.subr.bf16.mxu0 0
  %585 = vmatpush1.bf16.msra.mxu0 %v562
  %586 = vmatprep.subr.bf16.mxu0 0
  %587 = vmatpush1.bf16.msra.mxu0 %v563
  %588 = vmatprep.subr.bf16.mxu0 0
  %589 = vmatpush1.bf16.msra.mxu0 0
  %590 = vmatprep.subr.bf16.mxu0 0
  %591 = vmatpush1.bf16.msra.mxu0 0
  %592 = vmatprep.subr.bf16.mxu0 0
  %593 = vmatpush1.bf16.msra.mxu0 0
  %594 = vmatprep.subr.bf16.mxu0 0
  %595 = vmatpush1.bf16.msra.mxu0 0
  %596 = vmatprep.subr.bf16.mxu0 0
  %597 = vmatpush1.bf16.msra.mxu0 0
  %598 = vmatprep.subr.bf16.mxu0 0
  %599 = vmatpush1.bf16.msra.mxu0 0
  %600 = vmatprep.subr.bf16.mxu0 0
  %601 = vmatpush1.bf16.msra.mxu0 0
  %602 = vmatprep.subr.bf16.mxu0 0
  %603 = vmatpush1.bf16.msra.mxu0 0
  %604 = vmatprep.mubr.bf16.mxu0 0
  %605 = vmatmul.mubr.bf16.gmra.mrb[0].mxu0 %v500
  %v606 = vpop.f32.mrb[0].mxu0
  %v607 = vadd.f32 %v522, %v606
  %v608 = vpop.f32.mrb[0].mxu0
  %v609 = vpop.f32.mrb[0].mxu0
  %v610 = vadd.f32 %v522, %v609
  %v611 = vpop.f32.mrb[0].mxu0
  %612 = vdwg.mxu0
  %vm613 = vcmp.gt.f32.partialorder %v607, 0.0
  %vm614 = vcmp.gt.f32.partialorder %v610, 0.0
  %v615 = vmul.f32 %v607, 0.01
  %v616 = vmul.f32 %v610, 0.01
  %v617 = vsel %vm613, %v607, %v615
  %v618 = vsel %vm614, %v610, %v616
  %v619 = vpack.c.bf16 %v618, %v617
  %v620 = vld [vmem:[%s7] sm:$0xff]
  %v621 = vld [vmem:[%s7 + $0x8] sm:$0xff]
  %v622 = vld [vmem:[%s7 + $0x10] sm:$0xff]
  %v623 = vld [vmem:[%s7 + $0x18] sm:$0xff]
  %v624 = vld [vmem:[%s7 + $0x20] sm:$0xff]
  %v625 = vld [vmem:[%s7 + $0x28] sm:$0xff]
  %v626 = vld [vmem:[%s7 + $0x30] sm:$0xff]
  %v627 = vld [vmem:[%s7 + $0x38] sm:$0xff]
  %v628 = vld [vmem:[%s7 + $0x40] sm:$0xff]
  %v629 = vld [vmem:[%s7 + $0x48] sm:$0xff]
  %v630 = vld [vmem:[%s7 + $0x50] sm:$0xff]
  %v631 = vld [vmem:[%s7 + $0x58] sm:$0xff]
  %v632 = vld [vmem:[%s7 + $0x60] sm:$0xff]
  %v633 = vld [vmem:[%s7 + $0x68] sm:$0xff]
  %v634 = vld [vmem:[%s7 + $0x70] sm:$0xff]
  %v635 = vld [vmem:[%s7 + $0x78] sm:$0xff]
  %v636 = vld [vmem:[%s7 + $0x80] sm:$0xff]
  %v637 = vld [vmem:[%s7 + $0x88] sm:$0xff]
  %v638 = vld [vmem:[%s7 + $0x90] sm:$0xff]
  %v639 = vld [vmem:[%s7 + $0x98] sm:$0xff]
  %v640 = vld [vmem:[%s7 + $0xa0] sm:$0xff]
  %v641 = vld [vmem:[%s7 + $0xa8] sm:$0xff]
  %v642 = vld [vmem:[%s7 + $0xb0] sm:$0xff]
  %v643 = vld [vmem:[%s7 + $0xb8] sm:$0xff]
  %v644 = vld [vmem:[%s7 + $0xc0] sm:$0xff]
  %v645 = vld [vmem:[%s7 + $0xc8] sm:$0xff]
  %v646 = vld [vmem:[%s7 + $0xd0] sm:$0xff]
  %v647 = vld [vmem:[%s7 + $0xd8] sm:$0xff]
  %v648 = vld [vmem:[%s7 + $0xe0] sm:$0xff]
  %v649 = vld [vmem:[%s7 + $0xe8] sm:$0xff]
  %v650 = vld [vmem:[%s7 + $0xf0] sm:$0xff]
  %v651 = vld [vmem:[%s7 + $0xf8] sm:$0xff]
  %v652 = vld [vmem:[%s8] sm:$0xf]
  %v654 = vlaneseq
  %v655 = vshrl.u32 %v654, 7
  %v656 = vsub.s32 0, %v655
  %v657 = vrot.slane %v652, %v656
  %v658 = vlaneseq
  %v659 = vshrl.u32 %v658, 7
  %v660 = vsub.s32 1, %v659
  %v661 = vrot.slane %v652, %v660
  %v662 = vlaneseq
  %v663 = vshrl.u32 %v662, 7
  %v664 = vsub.s32 2, %v663
  %v665 = vrot.slane %v652, %v664
  %v666 = vlaneseq
  %v667 = vshrl.u32 %v666, 7
  %v668 = vsub.s32 3, %v667
  %v669 = vrot.slane %v652, %v668
  %v706 = vunpack.c.l.b16 %v620
  %v707 = vunpack.c.h.b16 %v620
  %v708 = vunpack.c.l.b16 %v621
  %v709 = vunpack.c.h.b16 %v621
  %v710 = vunpack.c.l.b16 %v622
  %v711 = vunpack.c.h.b16 %v622
  %v712 = vunpack.c.l.b16 %v623
  %v713 = vunpack.c.h.b16 %v623
  %v714 = vunpack.c.l.b16 %v624
  %v715 = vunpack.c.h.b16 %v624
  %v716 = vunpack.c.l.b16 %v625
  %v717 = vunpack.c.h.b16 %v625
  %v718 = vunpack.c.l.b16 %v626
  %v719 = vunpack.c.h.b16 %v626
  %v720 = vunpack.c.l.b16 %v627
  %v721 = vunpack.c.h.b16 %v627
  %v722 = vunpack.c.l.b16 %v628
  %v723 = vunpack.c.h.b16 %v628
  %v724 = vunpack.c.l.b16 %v629
  %v725 = vunpack.c.h.b16 %v629
  %v726 = vunpack.c.l.b16 %v630
  %v727 = vunpack.c.h.b16 %v630
  %v728 = vunpack.c.l.b16 %v631
  %v729 = vunpack.c.h.b16 %v631
  %v730 = vunpack.c.l.b16 %v632
  %v731 = vunpack.c.h.b16 %v632
  %v732 = vunpack.c.l.b16 %v633
  %v733 = vunpack.c.h.b16 %v633
  %v734 = vunpack.c.l.b16 %v634
  %v735 = vunpack.c.h.b16 %v634
  %v736 = vunpack.c.l.b16 %v635
  %v737 = vunpack.c.h.b16 %v635
  %v738 = vunpack.c.l.b16 %v636
  %v739 = vunpack.c.h.b16 %v636
  %v740 = vunpack.c.l.b16 %v637
  %v741 = vunpack.c.h.b16 %v637
  %v742 = vunpack.c.l.b16 %v638
  %v743 = vunpack.c.h.b16 %v638
  %v744 = vunpack.c.l.b16 %v639
  %v745 = vunpack.c.h.b16 %v639
  %v746 = vunpack.c.l.b16 %v640
  %v747 = vunpack.c.h.b16 %v640
  %v748 = vunpack.c.l.b16 %v641
  %v749 = vunpack.c.h.b16 %v641
  %v750 = vunpack.c.l.b16 %v642
  %v751 = vunpack.c.h.b16 %v642
  %v752 = vunpack.c.l.b16 %v643
  %v753 = vunpack.c.h.b16 %v643
  %v754 = vunpack.c.l.b16 %v644
  %v755 = vunpack.c.h.b16 %v644
  %v756 = vunpack.c.l.b16 %v645
  %v757 = vunpack.c.h.b16 %v645
  %v758 = vunpack.c.l.b16 %v646
  %v759 = vunpack.c.h.b16 %v646
  %v760 = vunpack.c.l.b16 %v647
  %v761 = vunpack.c.h.b16 %v647
  %v762 = vunpack.c.l.b16 %v648
  %v763 = vunpack.c.h.b16 %v648
  %v764 = vunpack.c.l.b16 %v649
  %v765 = vunpack.c.h.b16 %v649
  %v766 = vunpack.c.l.b16 %v650
  %v767 = vunpack.c.h.b16 %v650
  %v768 = vunpack.c.l.b16 %v651
  %v769 = vunpack.c.h.b16 %v651
  %v770 = vpack.c.b16 %v710, %v706
  %v771 = vpack.c.b16 %v711, %v707
  %v772 = vpack.c.b16 %v712, %v708
  %v773 = vpack.c.b16 %v713, %v709
  %v774 = vpack.c.b16 %v718, %v714
  %v775 = vpack.c.b16 %v719, %v715
  %v776 = vpack.c.b16 %v720, %v716
  %v777 = vpack.c.b16 %v721, %v717
  %v778 = vpack.c.b16 %v726, %v722
  %v779 = vpack.c.b16 %v727, %v723
  %v780 = vpack.c.b16 %v728, %v724
  %v781 = vpack.c.b16 %v729, %v725
  %v782 = vpack.c.b16 %v734, %v730
  %v783 = vpack.c.b16 %v735, %v731
  %v784 = vpack.c.b16 %v736, %v732
  %v785 = vpack.c.b16 %v737, %v733
  %v786 = vpack.c.b16 %v742, %v738
  %v787 = vpack.c.b16 %v743, %v739
  %v788 = vpack.c.b16 %v744, %v740
  %v789 = vpack.c.b16 %v745, %v741
  %v790 = vpack.c.b16 %v750, %v746
  %v791 = vpack.c.b16 %v751, %v747
  %v792 = vpack.c.b16 %v752, %v748
  %v793 = vpack.c.b16 %v753, %v749
  %v794 = vpack.c.b16 %v758, %v754
  %v795 = vpack.c.b16 %v759, %v755
  %v796 = vpack.c.b16 %v760, %v756
  %v797 = vpack.c.b16 %v761, %v757
  %v798 = vpack.c.b16 %v766, %v762
  %v799 = vpack.c.b16 %v767, %v763
  %v800 = vpack.c.b16 %v768, %v764
  %v801 = vpack.c.b16 %v769, %v765
  %834 = vmatprep.subr.bf16.mxu0 %v771
  %835 = vmatpush1.bf16.msra.mxu0 %v770
  %836 = vmatprep.subr.bf16.mxu0 %v775
  %837 = vmatpush1.bf16.msra.mxu0 %v774
  %838 = vmatprep.subr.bf16.mxu0 %v779
  %839 = vmatpush1.bf16.msra.mxu0 %v778
  %840 = vmatprep.subr.bf16.mxu0 %v783
  %841 = vmatpush1.bf16.msra.mxu0 %v782
  %842 = vmatprep.subr.bf16.mxu0 %v787
  %843 = vmatpush1.bf16.msra.mxu0 %v786
  %844 = vmatprep.subr.bf16.mxu0 %v791
  %845 = vmatpush1.bf16.msra.mxu0 %v790
  %846 = vmatprep.subr.bf16.mxu0 %v795
  %847 = vmatpush1.bf16.msra.mxu0 %v794
  %848 = vmatprep.subr.bf16.mxu0 %v799
  %849 = vmatpush1.bf16.msra.mxu0 %v798
  %850 = vmatprep.subr.bf16.mxu0 0
  %851 = vmatpush1.bf16.msra.mxu0 0
  %852 = vmatprep.subr.bf16.mxu0 0
  %853 = vmatpush1.bf16.msra.mxu0 0
  %854 = vmatprep.subr.bf16.mxu0 0
  %855 = vmatpush1.bf16.msra.mxu0 0
  %856 = vmatprep.subr.bf16.mxu0 0
  %857 = vmatpush1.bf16.msra.mxu0 0
  %858 = vmatprep.subr.bf16.mxu0 0
  %859 = vmatpush1.bf16.msra.mxu0 0
  %860 = vmatprep.subr.bf16.mxu0 0
  %861 = vmatpush1.bf16.msra.mxu0 0
  %862 = vmatprep.subr.bf16.mxu0 0
  %863 = vmatpush1.bf16.msra.mxu0 0
  %864 = vmatprep.subr.bf16.mxu0 0
  %865 = vmatpush1.bf16.msra.mxu0 0
  %866 = vmatprep.mubr.bf16.mxu0 0
  %867 = vmatmul.mubr.bf16.gmra.mrb[0].mxu0 %v619
  %v868 = vpop.f32.mrb[0].mxu0
  %v869 = vadd.f32 %v657, %v868
  %v870 = vpop.f32.mrb[0].mxu0
  %v871 = vadd.f32 %v661, %v870
  %v872 = vpop.f32.mrb[0].mxu0
  %v873 = vadd.f32 %v657, %v872
  %v874 = vpop.f32.mrb[0].mxu0
  %v875 = vadd.f32 %v661, %v874
  %876 = vdwg.mxu0
  %877 = vmatprep.subr.bf16.mxu0 %v773
  %878 = vmatpush1.bf16.msra.mxu0 %v772
  %879 = vmatprep.subr.bf16.mxu0 %v777
  %880 = vmatpush1.bf16.msra.mxu0 %v776
  %881 = vmatprep.subr.bf16.mxu0 %v781
  %882 = vmatpush1.bf16.msra.mxu0 %v780
  %883 = vmatprep.subr.bf16.mxu0 %v785
  %884 = vmatpush1.bf16.msra.mxu0 %v784
  %885 = vmatprep.subr.bf16.mxu0 %v789
  %886 = vmatpush1.bf16.msra.mxu0 %v788
  %887 = vmatprep.subr.bf16.mxu0 %v793
  %888 = vmatpush1.bf16.msra.mxu0 %v792
  %889 = vmatprep.subr.bf16.mxu0 %v797
  %890 = vmatpush1.bf16.msra.mxu0 %v796
  %891 = vmatprep.subr.bf16.mxu0 %v801
  %892 = vmatpush1.bf16.msra.mxu0 %v800
  %893 = vmatprep.subr.bf16.mxu0 0
  %894 = vmatpush1.bf16.msra.mxu0 0
  %895 = vmatprep.subr.bf16.mxu0 0
  %896 = vmatpush1.bf16.msra.mxu0 0
  %897 = vmatprep.subr.bf16.mxu0 0
  %898 = vmatpush1.bf16.msra.mxu0 0
  %899 = vmatprep.subr.bf16.mxu0 0
  %900 = vmatpush1.bf16.msra.mxu0 0
  %901 = vmatprep.subr.bf16.mxu0 0
  %902 = vmatpush1.bf16.msra.mxu0 0
  %903 = vmatprep.subr.bf16.mxu0 0
  %904 = vmatpush1.bf16.msra.mxu0 0
  %905 = vmatprep.subr.bf16.mxu0 0
  %906 = vmatpush1.bf16.msra.mxu0 0
  %907 = vmatprep.subr.bf16.mxu0 0
  %908 = vmatpush1.bf16.msra.mxu0 0
  %909 = vmatprep.mubr.bf16.mxu0 0
  %910 = vmatmul.mubr.bf16.gmra.mrb[0].mxu0 %v619
  %v911 = vpop.f32.mrb[0].mxu0
  %v912 = vadd.f32 %v665, %v911
  %v913 = vpop.f32.mrb[0].mxu0
  %v914 = vadd.f32 %v669, %v913
  %v915 = vpop.f32.mrb[0].mxu0
  %v916 = vadd.f32 %v665, %v915
  %v917 = vpop.f32.mrb[0].mxu0
  %v918 = vadd.f32 %v669, %v917
  %919 = vdwg.mxu0
  %vm920 = vcmp.gt.f32.partialorder %v869, 0.0
  %vm921 = vcmp.gt.f32.partialorder %v871, 0.0
  %vm922 = vcmp.gt.f32.partialorder %v912, 0.0
  %vm923 = vcmp.gt.f32.partialorder %v914, 0.0
  %vm924 = vcmp.gt.f32.partialorder %v873, 0.0
  %vm925 = vcmp.gt.f32.partialorder %v875, 0.0
  %vm926 = vcmp.gt.f32.partialorder %v916, 0.0
  %vm927 = vcmp.gt.f32.partialorder %v918, 0.0
  %v928 = vmul.f32 %v869, 0.01
  %v929 = vmul.f32 %v871, 0.01
  %v930 = vmul.f32 %v912, 0.01
  %v931 = vmul.f32 %v914, 0.01
  %v932 = vmul.f32 %v873, 0.01
  %v933 = vmul.f32 %v875, 0.01
  %v934 = vmul.f32 %v916, 0.01
  %v935 = vmul.f32 %v918, 0.01
  %v936 = vsel %vm920, %v869, %v928
  %v937 = vsel %vm921, %v871, %v929
  %v938 = vsel %vm922, %v912, %v930
  %v939 = vsel %vm923, %v914, %v931
  %v940 = vsel %vm924, %v873, %v932
  %v941 = vsel %vm925, %v875, %v933
  %v942 = vsel %vm926, %v916, %v934
  %v943 = vsel %vm927, %v918, %v935
  %v944 = vpack.c.bf16 %v940, %v936
  %v945 = vpack.c.bf16 %v941, %v937
  %v946 = vpack.c.bf16 %v942, %v938
  %v947 = vpack.c.bf16 %v943, %v939
  %v948 = vld [vmem:[%s9] sm:$0xff]
  %v949 = vld [vmem:[%s9 + $0x8] sm:$0xf]
  %v950 = vld [vmem:[%s9 + $0xc] sm:$0xff]
  %v951 = vld [vmem:[%s9 + $0x14] sm:$0xf]
  %v952 = vld [vmem:[%s9 + $0x18] sm:$0xff]
  %v953 = vld [vmem:[%s9 + $0x20] sm:$0xf]
  %v954 = vld [vmem:[%s9 + $0x24] sm:$0xff]
  %v955 = vld [vmem:[%s9 + $0x2c] sm:$0xf]
  %v956 = vld [vmem:[%s9 + $0x30] sm:$0xff]
  %v957 = vld [vmem:[%s9 + $0x38] sm:$0xf]
  %v958 = vld [vmem:[%s9 + $0x3c] sm:$0xff]
  %v959 = vld [vmem:[%s9 + $0x44] sm:$0xf]
  %v960 = vld [vmem:[%s9 + $0x48] sm:$0xff]
  %v961 = vld [vmem:[%s9 + $0x50] sm:$0xf]
  %v962 = vld [vmem:[%s9 + $0x54] sm:$0xff]
  %v963 = vld [vmem:[%s9 + $0x5c] sm:$0xf]
  %v964 = vld [vmem:[%s9 + $0x60] sm:$0xff]
  %v965 = vld [vmem:[%s9 + $0x68] sm:$0xf]
  %v966 = vld [vmem:[%s9 + $0x6c] sm:$0xff]
  %v967 = vld [vmem:[%s9 + $0x74] sm:$0xf]
  %v968 = vld [vmem:[%s9 + $0x78] sm:$0xff]
  %v969 = vld [vmem:[%s9 + $0x80] sm:$0xf]
  %v970 = vld [vmem:[%s9 + $0x84] sm:$0xff]
  %v971 = vld [vmem:[%s9 + $0x8c] sm:$0xf]
  %v972 = vld [vmem:[%s9 + $0x90] sm:$0xff]
  %v973 = vld [vmem:[%s9 + $0x98] sm:$0xf]
  %v974 = vld [vmem:[%s9 + $0x9c] sm:$0xff]
  %v975 = vld [vmem:[%s9 + $0xa4] sm:$0xf]
  %v976 = vld [vmem:[%s9 + $0xa8] sm:$0xff]
  %v977 = vld [vmem:[%s9 + $0xb0] sm:$0xf]
  %v978 = vld [vmem:[%s9 + $0xb4] sm:$0xff]
  %v979 = vld [vmem:[%s9 + $0xbc] sm:$0xf]
  %v980 = vld [vmem:[%s9 + $0xc0] sm:$0xff]
  %v981 = vld [vmem:[%s9 + $0xc8] sm:$0xf]
  %v982 = vld [vmem:[%s9 + $0xcc] sm:$0xff]
  %v983 = vld [vmem:[%s9 + $0xd4] sm:$0xf]
  %v984 = vld [vmem:[%s9 + $0xd8] sm:$0xff]
  %v985 = vld [vmem:[%s9 + $0xe0] sm:$0xf]
  %v986 = vld [vmem:[%s9 + $0xe4] sm:$0xff]
  %v987 = vld [vmem:[%s9 + $0xec] sm:$0xf]
  %v988 = vld [vmem:[%s9 + $0xf0] sm:$0xff]
  %v989 = vld [vmem:[%s9 + $0xf8] sm:$0xf]
  %v990 = vld [vmem:[%s9 + $0xfc] sm:$0xff]
  %v991 = vld [vmem:[%s9 + $0x104] sm:$0xf]
  %v992 = vld [vmem:[%s9 + $0x108] sm:$0xff]
  %v993 = vld [vmem:[%s9 + $0x110] sm:$0xf]
  %v994 = vld [vmem:[%s9 + $0x114] sm:$0xff]
  %v995 = vld [vmem:[%s9 + $0x11c] sm:$0xf]
  %v996 = vld [vmem:[%s9 + $0x120] sm:$0xff]
  %v997 = vld [vmem:[%s9 + $0x128] sm:$0xf]
  %v998 = vld [vmem:[%s9 + $0x12c] sm:$0xff]
  %v999 = vld [vmem:[%s9 + $0x134] sm:$0xf]
  %v1000 = vld [vmem:[%s9 + $0x138] sm:$0xff]
  %v1001 = vld [vmem:[%s9 + $0x140] sm:$0xf]
  %v1002 = vld [vmem:[%s9 + $0x144] sm:$0xff]
  %v1003 = vld [vmem:[%s9 + $0x14c] sm:$0xf]
  %v1004 = vld [vmem:[%s9 + $0x150] sm:$0xff]
  %v1005 = vld [vmem:[%s9 + $0x158] sm:$0xf]
  %v1006 = vld [vmem:[%s9 + $0x15c] sm:$0xff]
  %v1007 = vld [vmem:[%s9 + $0x164] sm:$0xf]
  %v1008 = vld [vmem:[%s9 + $0x168] sm:$0xff]
  %v1009 = vld [vmem:[%s9 + $0x170] sm:$0xf]
  %v1010 = vld [vmem:[%s9 + $0x174] sm:$0xff]
  %v1011 = vld [vmem:[%s9 + $0x17c] sm:$0xf]
  %v1012 = vld [vmem:[%s9 + $0x180] sm:$0xff]
  %v1013 = vld [vmem:[%s9 + $0x188] sm:$0xf]
  %v1014 = vld [vmem:[%s9 + $0x18c] sm:$0xff]
  %v1015 = vld [vmem:[%s9 + $0x194] sm:$0xf]
  %v1016 = vld [vmem:[%s9 + $0x198] sm:$0xff]
  %v1017 = vld [vmem:[%s9 + $0x1a0] sm:$0xf]
  %v1018 = vld [vmem:[%s9 + $0x1a4] sm:$0xff]
  %v1019 = vld [vmem:[%s9 + $0x1ac] sm:$0xf]
  %v1020 = vld [vmem:[%s9 + $0x1b0] sm:$0xff]
  %v1021 = vld [vmem:[%s9 + $0x1b8] sm:$0xf]
  %v1022 = vld [vmem:[%s9 + $0x1bc] sm:$0xff]
  %v1023 = vld [vmem:[%s9 + $0x1c4] sm:$0xf]
  %v1024 = vld [vmem:[%s9 + $0x1c8] sm:$0xff]
  %v1025 = vld [vmem:[%s9 + $0x1d0] sm:$0xf]
  %v1026 = vld [vmem:[%s9 + $0x1d4] sm:$0xff]
  %v1027 = vld [vmem:[%s9 + $0x1dc] sm:$0xf]
  %v1028 = vld [vmem:[%s9 + $0x1e0] sm:$0xff]
  %v1029 = vld [vmem:[%s9 + $0x1e8] sm:$0xf]
  %v1030 = vld [vmem:[%s9 + $0x1ec] sm:$0xff]
  %v1031 = vld [vmem:[%s9 + $0x1f4] sm:$0xf]
  %v1032 = vld [vmem:[%s9 + $0x1f8] sm:$0xff]
  %v1033 = vld [vmem:[%s9 + $0x200] sm:$0xf]
  %v1034 = vld [vmem:[%s9 + $0x204] sm:$0xff]
  %v1035 = vld [vmem:[%s9 + $0x20c] sm:$0xf]
  %v1036 = vld [vmem:[%s9 + $0x210] sm:$0xff]
  %v1037 = vld [vmem:[%s9 + $0x218] sm:$0xf]
  %v1038 = vld [vmem:[%s9 + $0x21c] sm:$0xff]
  %v1039 = vld [vmem:[%s9 + $0x224] sm:$0xf]
  %v1040 = vld [vmem:[%s9 + $0x228] sm:$0xff]
  %v1041 = vld [vmem:[%s9 + $0x230] sm:$0xf]
  %v1042 = vld [vmem:[%s9 + $0x234] sm:$0xff]
  %v1043 = vld [vmem:[%s9 + $0x23c] sm:$0xf]
  %v1044 = vld [vmem:[%s9 + $0x240] sm:$0xff]
  %v1045 = vld [vmem:[%s9 + $0x248] sm:$0xf]
  %v1046 = vld [vmem:[%s9 + $0x24c] sm:$0xff]
  %v1047 = vld [vmem:[%s9 + $0x254] sm:$0xf]
  %v1048 = vld [vmem:[%s9 + $0x258] sm:$0xff]
  %v1049 = vld [vmem:[%s9 + $0x260] sm:$0xf]
  %v1050 = vld [vmem:[%s9 + $0x264] sm:$0xff]
  %v1051 = vld [vmem:[%s9 + $0x26c] sm:$0xf]
  %v1052 = vld [vmem:[%s9 + $0x270] sm:$0xff]
  %v1053 = vld [vmem:[%s9 + $0x278] sm:$0xf]
  %v1054 = vld [vmem:[%s9 + $0x27c] sm:$0xff]
  %v1055 = vld [vmem:[%s9 + $0x284] sm:$0xf]
  %v1056 = vld [vmem:[%s9 + $0x288] sm:$0xff]
  %v1057 = vld [vmem:[%s9 + $0x290] sm:$0xf]
  %v1058 = vld [vmem:[%s9 + $0x294] sm:$0xff]
  %v1059 = vld [vmem:[%s9 + $0x29c] sm:$0xf]
  %v1060 = vld [vmem:[%s9 + $0x2a0] sm:$0xff]
  %v1061 = vld [vmem:[%s9 + $0x2a8] sm:$0xf]
  %v1062 = vld [vmem:[%s9 + $0x2ac] sm:$0xff]
  %v1063 = vld [vmem:[%s9 + $0x2b4] sm:$0xf]
  %v1064 = vld [vmem:[%s9 + $0x2b8] sm:$0xff]
  %v1065 = vld [vmem:[%s9 + $0x2c0] sm:$0xf]
  %v1066 = vld [vmem:[%s9 + $0x2c4] sm:$0xff]
  %v1067 = vld [vmem:[%s9 + $0x2cc] sm:$0xf]
  %v1068 = vld [vmem:[%s9 + $0x2d0] sm:$0xff]
  %v1069 = vld [vmem:[%s9 + $0x2d8] sm:$0xf]
  %v1070 = vld [vmem:[%s9 + $0x2dc] sm:$0xff]
  %v1071 = vld [vmem:[%s9 + $0x2e4] sm:$0xf]
  %v1072 = vld [vmem:[%s9 + $0x2e8] sm:$0xff]
  %v1073 = vld [vmem:[%s9 + $0x2f0] sm:$0xf]
  %v1074 = vld [vmem:[%s9 + $0x2f4] sm:$0xff]
  %v1075 = vld [vmem:[%s9 + $0x2fc] sm:$0xf]
  %v1076 = vld [vmem:[%s10] sm:$0x7]
  %v1078 = vlaneseq
  %v1079 = vshrl.u32 %v1078, 7
  %v1080 = vsub.s32 0, %v1079
  %v1081 = vrot.slane %v1076, %v1080
  %v1082 = vlaneseq
  %v1083 = vshrl.u32 %v1082, 7
  %v1084 = vsub.s32 1, %v1083
  %v1085 = vrot.slane %v1076, %v1084
  %v1086 = vlaneseq
  %v1087 = vshrl.u32 %v1086, 7
  %v1088 = vsub.s32 2, %v1087
  %v1089 = vrot.slane %v1076, %v1088
  %v1221 = vunpack.c.l.b16 %v948
  %v1222 = vunpack.c.h.b16 %v948
  %v1223 = vunpack.c.l.b16 %v949
  %v1224 = vunpack.c.l.b16 %v950
  %v1225 = vunpack.c.h.b16 %v950
  %v1226 = vunpack.c.l.b16 %v951
  %v1227 = vunpack.c.l.b16 %v952
  %v1228 = vunpack.c.h.b16 %v952
  %v1229 = vunpack.c.l.b16 %v953
  %v1230 = vunpack.c.l.b16 %v954
  %v1231 = vunpack.c.h.b16 %v954
  %v1232 = vunpack.c.l.b16 %v955
  %v1233 = vunpack.c.l.b16 %v956
  %v1234 = vunpack.c.h.b16 %v956
  %v1235 = vunpack.c.l.b16 %v957
  %v1236 = vunpack.c.l.b16 %v958
  %v1237 = vunpack.c.h.b16 %v958
  %v1238 = vunpack.c.l.b16 %v959
  %v1239 = vunpack.c.l.b16 %v960
  %v1240 = vunpack.c.h.b16 %v960
  %v1241 = vunpack.c.l.b16 %v961
  %v1242 = vunpack.c.l.b16 %v962
  %v1243 = vunpack.c.h.b16 %v962
  %v1244 = vunpack.c.l.b16 %v963
  %v1245 = vunpack.c.l.b16 %v964
  %v1246 = vunpack.c.h.b16 %v964
  %v1247 = vunpack.c.l.b16 %v965
  %v1248 = vunpack.c.l.b16 %v966
  %v1249 = vunpack.c.h.b16 %v966
  %v1250 = vunpack.c.l.b16 %v967
  %v1251 = vunpack.c.l.b16 %v968
  %v1252 = vunpack.c.h.b16 %v968
  %v1253 = vunpack.c.l.b16 %v969
  %v1254 = vunpack.c.l.b16 %v970
  %v1255 = vunpack.c.h.b16 %v970
  %v1256 = vunpack.c.l.b16 %v971
  %v1257 = vunpack.c.l.b16 %v972
  %v1258 = vunpack.c.h.b16 %v972
  %v1259 = vunpack.c.l.b16 %v973
  %v1260 = vunpack.c.l.b16 %v974
  %v1261 = vunpack.c.h.b16 %v974
  %v1262 = vunpack.c.l.b16 %v975
  %v1263 = vunpack.c.l.b16 %v976
  %v1264 = vunpack.c.h.b16 %v976
  %v1265 = vunpack.c.l.b16 %v977
  %v1266 = vunpack.c.l.b16 %v978
  %v1267 = vunpack.c.h.b16 %v978
  %v1268 = vunpack.c.l.b16 %v979
  %v1269 = vunpack.c.l.b16 %v980
  %v1270 = vunpack.c.h.b16 %v980
  %v1271 = vunpack.c.l.b16 %v981
  %v1272 = vunpack.c.l.b16 %v982
  %v1273 = vunpack.c.h.b16 %v982
  %v1274 = vunpack.c.l.b16 %v983
  %v1275 = vunpack.c.l.b16 %v984
  %v1276 = vunpack.c.h.b16 %v984
  %v1277 = vunpack.c.l.b16 %v985
  %v1278 = vunpack.c.l.b16 %v986
  %v1279 = vunpack.c.h.b16 %v986
  %v1280 = vunpack.c.l.b16 %v987
  %v1281 = vunpack.c.l.b16 %v988
  %v1282 = vunpack.c.h.b16 %v988
  %v1283 = vunpack.c.l.b16 %v989
  %v1284 = vunpack.c.l.b16 %v990
  %v1285 = vunpack.c.h.b16 %v990
  %v1286 = vunpack.c.l.b16 %v991
  %v1287 = vunpack.c.l.b16 %v992
  %v1288 = vunpack.c.h.b16 %v992
  %v1289 = vunpack.c.l.b16 %v993
  %v1290 = vunpack.c.l.b16 %v994
  %v1291 = vunpack.c.h.b16 %v994
  %v1292 = vunpack.c.l.b16 %v995
  %v1293 = vunpack.c.l.b16 %v996
  %v1294 = vunpack.c.h.b16 %v996
  %v1295 = vunpack.c.l.b16 %v997
  %v1296 = vunpack.c.l.b16 %v998
  %v1297 = vunpack.c.h.b16 %v998
  %v1298 = vunpack.c.l.b16 %v999
  %v1299 = vunpack.c.l.b16 %v1000
  %v1300 = vunpack.c.h.b16 %v1000
  %v1301 = vunpack.c.l.b16 %v1001
  %v1302 = vunpack.c.l.b16 %v1002
  %v1303 = vunpack.c.h.b16 %v1002
  %v1304 = vunpack.c.l.b16 %v1003
  %v1305 = vunpack.c.l.b16 %v1004
  %v1306 = vunpack.c.h.b16 %v1004
  %v1307 = vunpack.c.l.b16 %v1005
  %v1308 = vunpack.c.l.b16 %v1006
  %v1309 = vunpack.c.h.b16 %v1006
  %v1310 = vunpack.c.l.b16 %v1007
  %v1311 = vunpack.c.l.b16 %v1008
  %v1312 = vunpack.c.h.b16 %v1008
  %v1313 = vunpack.c.l.b16 %v1009
  %v1314 = vunpack.c.l.b16 %v1010
  %v1315 = vunpack.c.h.b16 %v1010
  %v1316 = vunpack.c.l.b16 %v1011
  %v1317 = vunpack.c.l.b16 %v1012
  %v1318 = vunpack.c.h.b16 %v1012
  %v1319 = vunpack.c.l.b16 %v1013
  %v1320 = vunpack.c.l.b16 %v1014
  %v1321 = vunpack.c.h.b16 %v1014
  %v1322 = vunpack.c.l.b16 %v1015
  %v1323 = vunpack.c.l.b16 %v1016
  %v1324 = vunpack.c.h.b16 %v1016
  %v1325 = vunpack.c.l.b16 %v1017
  %v1326 = vunpack.c.l.b16 %v1018
  %v1327 = vunpack.c.h.b16 %v1018
  %v1328 = vunpack.c.l.b16 %v1019
  %v1329 = vunpack.c.l.b16 %v1020
  %v1330 = vunpack.c.h.b16 %v1020
  %v1331 = vunpack.c.l.b16 %v1021
  %v1332 = vunpack.c.l.b16 %v1022
  %v1333 = vunpack.c.h.b16 %v1022
  %v1334 = vunpack.c.l.b16 %v1023
  %v1335 = vunpack.c.l.b16 %v1024
  %v1336 = vunpack.c.h.b16 %v1024
  %v1337 = vunpack.c.l.b16 %v1025
  %v1338 = vunpack.c.l.b16 %v1026
  %v1339 = vunpack.c.h.b16 %v1026
  %v1340 = vunpack.c.l.b16 %v1027
  %v1341 = vunpack.c.l.b16 %v1028
  %v1342 = vunpack.c.h.b16 %v1028
  %v1343 = vunpack.c.l.b16 %v1029
  %v1344 = vunpack.c.l.b16 %v1030
  %v1345 = vunpack.c.h.b16 %v1030
  %v1346 = vunpack.c.l.b16 %v1031
  %v1347 = vunpack.c.l.b16 %v1032
  %v1348 = vunpack.c.h.b16 %v1032
  %v1349 = vunpack.c.l.b16 %v1033
  %v1350 = vunpack.c.l.b16 %v1034
  %v1351 = vunpack.c.h.b16 %v1034
  %v1352 = vunpack.c.l.b16 %v1035
  %v1353 = vunpack.c.l.b16 %v1036
  %v1354 = vunpack.c.h.b16 %v1036
  %v1355 = vunpack.c.l.b16 %v1037
  %v1356 = vunpack.c.l.b16 %v1038
  %v1357 = vunpack.c.h.b16 %v1038
  %v1358 = vunpack.c.l.b16 %v1039
  %v1359 = vunpack.c.l.b16 %v1040
  %v1360 = vunpack.c.h.b16 %v1040
  %v1361 = vunpack.c.l.b16 %v1041
  %v1362 = vunpack.c.l.b16 %v1042
  %v1363 = vunpack.c.h.b16 %v1042
  %v1364 = vunpack.c.l.b16 %v1043
  %v1365 = vunpack.c.l.b16 %v1044
  %v1366 = vunpack.c.h.b16 %v1044
  %v1367 = vunpack.c.l.b16 %v1045
  %v1368 = vunpack.c.l.b16 %v1046
  %v1369 = vunpack.c.h.b16 %v1046
  %v1370 = vunpack.c.l.b16 %v1047
  %v1371 = vunpack.c.l.b16 %v1048
  %v1372 = vunpack.c.h.b16 %v1048
  %v1373 = vunpack.c.l.b16 %v1049
  %v1374 = vunpack.c.l.b16 %v1050
  %v1375 = vunpack.c.h.b16 %v1050
  %v1376 = vunpack.c.l.b16 %v1051
  %v1377 = vunpack.c.l.b16 %v1052
  %v1378 = vunpack.c.h.b16 %v1052
  %v1379 = vunpack.c.l.b16 %v1053
  %v1380 = vunpack.c.l.b16 %v1054
  %v1381 = vunpack.c.h.b16 %v1054
  %v1382 = vunpack.c.l.b16 %v1055
  %v1383 = vunpack.c.l.b16 %v1056
  %v1384 = vunpack.c.h.b16 %v1056
  %v1385 = vunpack.c.l.b16 %v1057
  %v1386 = vunpack.c.l.b16 %v1058
  %v1387 = vunpack.c.h.b16 %v1058
  %v1388 = vunpack.c.l.b16 %v1059
  %v1389 = vunpack.c.l.b16 %v1060
  %v1390 = vunpack.c.h.b16 %v1060
  %v1391 = vunpack.c.l.b16 %v1061
  %v1392 = vunpack.c.l.b16 %v1062
  %v1393 = vunpack.c.h.b16 %v1062
  %v1394 = vunpack.c.l.b16 %v1063
  %v1395 = vunpack.c.l.b16 %v1064
  %v1396 = vunpack.c.h.b16 %v1064
  %v1397 = vunpack.c.l.b16 %v1065
  %v1398 = vunpack.c.l.b16 %v1066
  %v1399 = vunpack.c.h.b16 %v1066
  %v1400 = vunpack.c.l.b16 %v1067
  %v1401 = vunpack.c.l.b16 %v1068
  %v1402 = vunpack.c.h.b16 %v1068
  %v1403 = vunpack.c.l.b16 %v1069
  %v1404 = vunpack.c.l.b16 %v1070
  %v1405 = vunpack.c.h.b16 %v1070
  %v1406 = vunpack.c.l.b16 %v1071
  %v1407 = vunpack.c.l.b16 %v1072
  %v1408 = vunpack.c.h.b16 %v1072
  %v1409 = vunpack.c.l.b16 %v1073
  %v1410 = vunpack.c.l.b16 %v1074
  %v1411 = vunpack.c.h.b16 %v1074
  %v1412 = vunpack.c.l.b16 %v1075
  %v1413 = vpack.c.b16 %v1224, %v1221
  %v1414 = vpack.c.b16 %v1225, %v1222
  %v1415 = vpack.c.b16 %v1226, %v1223
  %v1416 = vpack.c.b16 %v1230, %v1227
  %v1417 = vpack.c.b16 %v1231, %v1228
  %v1418 = vpack.c.b16 %v1232, %v1229
  %v1419 = vpack.c.b16 %v1236, %v1233
  %v1420 = vpack.c.b16 %v1237, %v1234
  %v1421 = vpack.c.b16 %v1238, %v1235
  %v1422 = vpack.c.b16 %v1242, %v1239
  %v1423 = vpack.c.b16 %v1243, %v1240
  %v1424 = vpack.c.b16 %v1244, %v1241
  %v1425 = vpack.c.b16 %v1248, %v1245
  %v1426 = vpack.c.b16 %v1249, %v1246
  %v1427 = vpack.c.b16 %v1250, %v1247
  %v1428 = vpack.c.b16 %v1254, %v1251
  %v1429 = vpack.c.b16 %v1255, %v1252
  %v1430 = vpack.c.b16 %v1256, %v1253
  %v1431 = vpack.c.b16 %v1260, %v1257
  %v1432 = vpack.c.b16 %v1261, %v1258
  %v1433 = vpack.c.b16 %v1262, %v1259
  %v1434 = vpack.c.b16 %v1266, %v1263
  %v1435 = vpack.c.b16 %v1267, %v1264
  %v1436 = vpack.c.b16 %v1268, %v1265
  %v1437 = vpack.c.b16 %v1272, %v1269
  %v1438 = vpack.c.b16 %v1273, %v1270
  %v1439 = vpack.c.b16 %v1274, %v1271
  %v1440 = vpack.c.b16 %v1278, %v1275
  %v1441 = vpack.c.b16 %v1279, %v1276
  %v1442 = vpack.c.b16 %v1280, %v1277
  %v1443 = vpack.c.b16 %v1284, %v1281
  %v1444 = vpack.c.b16 %v1285, %v1282
  %v1445 = vpack.c.b16 %v1286, %v1283
  %v1446 = vpack.c.b16 %v1290, %v1287
  %v1447 = vpack.c.b16 %v1291, %v1288
  %v1448 = vpack.c.b16 %v1292, %v1289
  %v1449 = vpack.c.b16 %v1296, %v1293
  %v1450 = vpack.c.b16 %v1297, %v1294
  %v1451 = vpack.c.b16 %v1298, %v1295
  %v1452 = vpack.c.b16 %v1302, %v1299
  %v1453 = vpack.c.b16 %v1303, %v1300
  %v1454 = vpack.c.b16 %v1304, %v1301
  %v1455 = vpack.c.b16 %v1308, %v1305
  %v1456 = vpack.c.b16 %v1309, %v1306
  %v1457 = vpack.c.b16 %v1310, %v1307
  %v1458 = vpack.c.b16 %v1314, %v1311
  %v1459 = vpack.c.b16 %v1315, %v1312
  %v1460 = vpack.c.b16 %v1316, %v1313
  %v1461 = vpack.c.b16 %v1320, %v1317
  %v1462 = vpack.c.b16 %v1321, %v1318
  %v1463 = vpack.c.b16 %v1322, %v1319
  %v1464 = vpack.c.b16 %v1326, %v1323
  %v1465 = vpack.c.b16 %v1327, %v1324
  %v1466 = vpack.c.b16 %v1328, %v1325
  %v1467 = vpack.c.b16 %v1332, %v1329
  %v1468 = vpack.c.b16 %v1333, %v1330
  %v1469 = vpack.c.b16 %v1334, %v1331
  %v1470 = vpack.c.b16 %v1338, %v1335
  %v1471 = vpack.c.b16 %v1339, %v1336
  %v1472 = vpack.c.b16 %v1340, %v1337
  %v1473 = vpack.c.b16 %v1344, %v1341
  %v1474 = vpack.c.b16 %v1345, %v1342
  %v1475 = vpack.c.b16 %v1346, %v1343
  %v1476 = vpack.c.b16 %v1350, %v1347
  %v1477 = vpack.c.b16 %v1351, %v1348
  %v1478 = vpack.c.b16 %v1352, %v1349
  %v1479 = vpack.c.b16 %v1356, %v1353
  %v1480 = vpack.c.b16 %v1357, %v1354
  %v1481 = vpack.c.b16 %v1358, %v1355
  %v1482 = vpack.c.b16 %v1362, %v1359
  %v1483 = vpack.c.b16 %v1363, %v1360
  %v1484 = vpack.c.b16 %v1364, %v1361
  %v1485 = vpack.c.b16 %v1368, %v1365
  %v1486 = vpack.c.b16 %v1369, %v1366
  %v1487 = vpack.c.b16 %v1370, %v1367
  %v1488 = vpack.c.b16 %v1374, %v1371
  %v1489 = vpack.c.b16 %v1375, %v1372
  %v1490 = vpack.c.b16 %v1376, %v1373
  %v1491 = vpack.c.b16 %v1380, %v1377
  %v1492 = vpack.c.b16 %v1381, %v1378
  %v1493 = vpack.c.b16 %v1382, %v1379
  %v1494 = vpack.c.b16 %v1386, %v1383
  %v1495 = vpack.c.b16 %v1387, %v1384
  %v1496 = vpack.c.b16 %v1388, %v1385
  %v1497 = vpack.c.b16 %v1392, %v1389
  %v1498 = vpack.c.b16 %v1393, %v1390
  %v1499 = vpack.c.b16 %v1394, %v1391
  %v1500 = vpack.c.b16 %v1398, %v1395
  %v1501 = vpack.c.b16 %v1399, %v1396
  %v1502 = vpack.c.b16 %v1400, %v1397
  %v1503 = vpack.c.b16 %v1404, %v1401
  %v1504 = vpack.c.b16 %v1405, %v1402
  %v1505 = vpack.c.b16 %v1406, %v1403
  %v1506 = vpack.c.b16 %v1410, %v1407
  %v1507 = vpack.c.b16 %v1411, %v1408
  %v1508 = vpack.c.b16 %v1412, %v1409
  %1605 = vmatprep.subr.bf16.mxu0 %v1414
  %1606 = vmatpush1.bf16.msra.mxu0 %v1413
  %1607 = vmatprep.subr.bf16.mxu0 %v1417
  %1608 = vmatpush1.bf16.msra.mxu0 %v1416
  %1609 = vmatprep.subr.bf16.mxu0 %v1420
  %1610 = vmatpush1.bf16.msra.mxu0 %v1419
  %1611 = vmatprep.subr.bf16.mxu0 %v1423
  %1612 = vmatpush1.bf16.msra.mxu0 %v1422
  %1613 = vmatprep.subr.bf16.mxu0 %v1426
  %1614 = vmatpush1.bf16.msra.mxu0 %v1425
  %1615 = vmatprep.subr.bf16.mxu0 %v1429
  %1616 = vmatpush1.bf16.msra.mxu0 %v1428
  %1617 = vmatprep.subr.bf16.mxu0 %v1432
  %1618 = vmatpush1.bf16.msra.mxu0 %v1431
  %1619 = vmatprep.subr.bf16.mxu0 %v1435
  %1620 = vmatpush1.bf16.msra.mxu0 %v1434
  %1621 = vmatprep.subr.bf16.mxu0 %v1438
  %1622 = vmatpush1.bf16.msra.mxu0 %v1437
  %1623 = vmatprep.subr.bf16.mxu0 %v1441
  %1624 = vmatpush1.bf16.msra.mxu0 %v1440
  %1625 = vmatprep.subr.bf16.mxu0 %v1444
  %1626 = vmatpush1.bf16.msra.mxu0 %v1443
  %1627 = vmatprep.subr.bf16.mxu0 %v1447
  %1628 = vmatpush1.bf16.msra.mxu0 %v1446
  %1629 = vmatprep.subr.bf16.mxu0 %v1450
  %1630 = vmatpush1.bf16.msra.mxu0 %v1449
  %1631 = vmatprep.subr.bf16.mxu0 %v1453
  %1632 = vmatpush1.bf16.msra.mxu0 %v1452
  %1633 = vmatprep.subr.bf16.mxu0 %v1456
  %1634 = vmatpush1.bf16.msra.mxu0 %v1455
  %1635 = vmatprep.subr.bf16.mxu0 %v1459
  %1636 = vmatpush1.bf16.msra.mxu0 %v1458
  %1637 = vmatprep.mubr.bf16.mxu0 %v945
  %1638 = vmatmul.mubr.bf16.gmra.mrb[0].mxu0 %v944
  %v1639 = vpop.f32.mrb[0].mxu0
  %v1640 = vadd.f32 %v1081, %v1639
  %v1641 = vpop.f32.mrb[0].mxu0
  %v1642 = vadd.f32 %v1085, %v1641
  %v1643 = vpop.f32.mrb[0].mxu0
  %v1644 = vadd.f32 %v1081, %v1643
  %v1645 = vpop.f32.mrb[0].mxu0
  %v1646 = vadd.f32 %v1085, %v1645
  %1647 = vdwg.mxu0
  %1648 = vmatprep.subr.bf16.mxu0 %v1462
  %1649 = vmatpush1.bf16.msra.mxu0 %v1461
  %1650 = vmatprep.subr.bf16.mxu0 %v1465
  %1651 = vmatpush1.bf16.msra.mxu0 %v1464
  %1652 = vmatprep.subr.bf16.mxu0 %v1468
  %1653 = vmatpush1.bf16.msra.mxu0 %v1467
  %1654 = vmatprep.subr.bf16.mxu0 %v1471
  %1655 = vmatpush1.bf16.msra.mxu0 %v1470
  %1656 = vmatprep.subr.bf16.mxu0 %v1474
  %1657 = vmatpush1.bf16.msra.mxu0 %v1473
  %1658 = vmatprep.subr.bf16.mxu0 %v1477
  %1659 = vmatpush1.bf16.msra.mxu0 %v1476
  %1660 = vmatprep.subr.bf16.mxu0 %v1480
  %1661 = vmatpush1.bf16.msra.mxu0 %v1479
  %1662 = vmatprep.subr.bf16.mxu0 %v1483
  %1663 = vmatpush1.bf16.msra.mxu0 %v1482
  %1664 = vmatprep.subr.bf16.mxu0 %v1486
  %1665 = vmatpush1.bf16.msra.mxu0 %v1485
  %1666 = vmatprep.subr.bf16.mxu0 %v1489
  %1667 = vmatpush1.bf16.msra.mxu0 %v1488
  %1668 = vmatprep.subr.bf16.mxu0 %v1492
  %1669 = vmatpush1.bf16.msra.mxu0 %v1491
  %1670 = vmatprep.subr.bf16.mxu0 %v1495
  %1671 = vmatpush1.bf16.msra.mxu0 %v1494
  %1672 = vmatprep.subr.bf16.mxu0 %v1498
  %1673 = vmatpush1.bf16.msra.mxu0 %v1497
  %1674 = vmatprep.subr.bf16.mxu0 %v1501
  %1675 = vmatpush1.bf16.msra.mxu0 %v1500
  %1676 = vmatprep.subr.bf16.mxu0 %v1504
  %1677 = vmatpush1.bf16.msra.mxu0 %v1503
  %1678 = vmatprep.subr.bf16.mxu0 %v1507
  %1679 = vmatpush1.bf16.msra.mxu0 %v1506
  %1680 = vmatprep.mubr.bf16.mxu0 %v947
  %1681 = vmatmul.mubr.bf16.gmra.mrb[0].mxu0 %v946
  %v1682 = vpop.f32.mrb[0].mxu0
  %v1683 = vadd.f32 %v1640, %v1682
  %v1684 = vpop.f32.mrb[0].mxu0
  %v1685 = vadd.f32 %v1642, %v1684
  %v1686 = vpop.f32.mrb[0].mxu0
  %v1687 = vadd.f32 %v1644, %v1686
  %v1688 = vpop.f32.mrb[0].mxu0
  %v1689 = vadd.f32 %v1646, %v1688
  %1690 = vdwg.mxu0
  %1691 = vmatprep.subr.bf16.mxu0 0
  %1692 = vmatpush1.bf16.msra.mxu0 %v1415
  %1693 = vmatprep.subr.bf16.mxu0 0
  %1694 = vmatpush1.bf16.msra.mxu0 %v1418
  %1695 = vmatprep.subr.bf16.mxu0 0
  %1696 = vmatpush1.bf16.msra.mxu0 %v1421
  %1697 = vmatprep.subr.bf16.mxu0 0
  %1698 = vmatpush1.bf16.msra.mxu0 %v1424
  %1699 = vmatprep.subr.bf16.mxu0 0
  %1700 = vmatpush1.bf16.msra.mxu0 %v1427
  %1701 = vmatprep.subr.bf16.mxu0 0
  %1702 = vmatpush1.bf16.msra.mxu0 %v1430
  %1703 = vmatprep.subr.bf16.mxu0 0
  %1704 = vmatpush1.bf16.msra.mxu0 %v1433
  %1705 = vmatprep.subr.bf16.mxu0 0
  %1706 = vmatpush1.bf16.msra.mxu0 %v1436
  %1707 = vmatprep.subr.bf16.mxu0 0
  %1708 = vmatpush1.bf16.msra.mxu0 %v1439
  %1709 = vmatprep.subr.bf16.mxu0 0
  %1710 = vmatpush1.bf16.msra.mxu0 %v1442
  %1711 = vmatprep.subr.bf16.mxu0 0
  %1712 = vmatpush1.bf16.msra.mxu0 %v1445
  %1713 = vmatprep.subr.bf16.mxu0 0
  %1714 = vmatpush1.bf16.msra.mxu0 %v1448
  %1715 = vmatprep.subr.bf16.mxu0 0
  %1716 = vmatpush1.bf16.msra.mxu0 %v1451
  %1717 = vmatprep.subr.bf16.mxu0 0
  %1718 = vmatpush1.bf16.msra.mxu0 %v1454
  %1719 = vmatprep.subr.bf16.mxu0 0
  %1720 = vmatpush1.bf16.msra.mxu0 %v1457
  %1721 = vmatprep.subr.bf16.mxu0 0
  %1722 = vmatpush1.bf16.msra.mxu0 %v1460
  %1723 = vmatprep.mubr.bf16.mxu0 %v945
  %1724 = vmatmul.mubr.bf16.gmra.mrb[0].mxu0 %v944
  %v1725 = vpop.f32.mrb[0].mxu0
  %v1726 = vadd.f32 %v1089, %v1725
  %v1727 = vpop.f32.mrb[0].mxu0
  %v1728 = vpop.f32.mrb[0].mxu0
  %v1729 = vadd.f32 %v1089, %v1728
  %v1730 = vpop.f32.mrb[0].mxu0
  %1731 = vdwg.mxu0
  %1732 = vmatprep.subr.bf16.mxu0 0
  %1733 = vmatpush1.bf16.msra.mxu0 %v1463
  %1734 = vmatprep.subr.bf16.mxu0 0
  %1735 = vmatpush1.bf16.msra.mxu0 %v1466
  %1736 = vmatprep.subr.bf16.mxu0 0
  %1737 = vmatpush1.bf16.msra.mxu0 %v1469
  %1738 = vmatprep.subr.bf16.mxu0 0
  %1739 = vmatpush1.bf16.msra.mxu0 %v1472
  %1740 = vmatprep.subr.bf16.mxu0 0
  %1741 = vmatpush1.bf16.msra.mxu0 %v1475
  %1742 = vmatprep.subr.bf16.mxu0 0
  %1743 = vmatpush1.bf16.msra.mxu0 %v1478
  %1744 = vmatprep.subr.bf16.mxu0 0
  %1745 = vmatpush1.bf16.msra.mxu0 %v1481
  %1746 = vmatprep.subr.bf16.mxu0 0
  %1747 = vmatpush1.bf16.msra.mxu0 %v1484
  %1748 = vmatprep.subr.bf16.mxu0 0
  %1749 = vmatpush1.bf16.msra.mxu0 %v1487
  %1750 = vmatprep.subr.bf16.mxu0 0
  %1751 = vmatpush1.bf16.msra.mxu0 %v1490
  %1752 = vmatprep.subr.bf16.mxu0 0
  %1753 = vmatpush1.bf16.msra.mxu0 %v1493
  %1754 = vmatprep.subr.bf16.mxu0 0
  %1755 = vmatpush1.bf16.msra.mxu0 %v1496
  %1756 = vmatprep.subr.bf16.mxu0 0
  %1757 = vmatpush1.bf16.msra.mxu0 %v1499
  %1758 = vmatprep.subr.bf16.mxu0 0
  %1759 = vmatpush1.bf16.msra.mxu0 %v1502
  %1760 = vmatprep.subr.bf16.mxu0 0
  %1761 = vmatpush1.bf16.msra.mxu0 %v1505
  %1762 = vmatprep.subr.bf16.mxu0 0
  %1763 = vmatpush1.bf16.msra.mxu0 %v1508
  %1764 = vmatprep.mubr.bf16.mxu0 %v947
  %1765 = vmatmul.mubr.bf16.gmra.mrb[0].mxu0 %v946
  %v1766 = vpop.f32.mrb[0].mxu0
  %v1767 = vadd.f32 %v1726, %v1766
  %v1768 = vpop.f32.mrb[0].mxu0
  %v1769 = vpop.f32.mrb[0].mxu0
  %v1770 = vadd.f32 %v1729, %v1769
  %v1771 = vpop.f32.mrb[0].mxu0
  %1772 = vdwg.mxu0
  %vm1773 = vcmp.gt.f32.partialorder %v1683, 0.0
  %vm1774 = vcmp.gt.f32.partialorder %v1685, 0.0
  %vm1775 = vcmp.gt.f32.partialorder %v1767, 0.0
  %vm1776 = vcmp.gt.f32.partialorder %v1687, 0.0
  %vm1777 = vcmp.gt.f32.partialorder %v1689, 0.0
  %vm1778 = vcmp.gt.f32.partialorder %v1770, 0.0
  %v1779 = vmul.f32 %v1683, 0.01
  %v1780 = vmul.f32 %v1685, 0.01
  %v1781 = vmul.f32 %v1767, 0.01
  %v1782 = vmul.f32 %v1687, 0.01
  %v1783 = vmul.f32 %v1689, 0.01
  %v1784 = vmul.f32 %v1770, 0.01
  %v1785 = vsel %vm1773, %v1683, %v1779
  %v1786 = vsel %vm1774, %v1685, %v1780
  %v1787 = vsel %vm1775, %v1767, %v1781
  %v1788 = vsel %vm1776, %v1687, %v1782
  %v1789 = vsel %vm1777, %v1689, %v1783
  %v1790 = vsel %vm1778, %v1770, %v1784
  %v1791 = vpack.c.bf16 %v1788, %v1785
  %v1792 = vpack.c.bf16 %v1789, %v1786
  %v1793 = vpack.c.bf16 %v1790, %v1787
  %v1794 = vld [vmem:[%s11] sm:$0xf]
  %v1795 = vld [vmem:[%s11 + $0x4] sm:$0xf]
  %v1796 = vld [vmem:[%s11 + $0x8] sm:$0xf]
  %v1797 = vld [vmem:[%s11 + $0xc] sm:$0xf]
  %v1798 = vld [vmem:[%s11 + $0x10] sm:$0xf]
  %v1799 = vld [vmem:[%s11 + $0x14] sm:$0xf]
  %v1800 = vld [vmem:[%s11 + $0x18] sm:$0xf]
  %v1801 = vld [vmem:[%s11 + $0x1c] sm:$0xf]
  %v1802 = vld [vmem:[%s11 + $0x20] sm:$0xf]
  %v1803 = vld [vmem:[%s11 + $0x24] sm:$0xf]
  %v1804 = vld [vmem:[%s11 + $0x28] sm:$0xf]
  %v1805 = vld [vmem:[%s11 + $0x2c] sm:$0xf]
  %v1806 = vld [vmem:[%s11 + $0x30] sm:$0xf]
  %v1807 = vld [vmem:[%s11 + $0x34] sm:$0xf]
  %v1808 = vld [vmem:[%s11 + $0x38] sm:$0xf]
  %v1809 = vld [vmem:[%s11 + $0x3c] sm:$0xf]
  %v1810 = vld [vmem:[%s11 + $0x40] sm:$0xf]
  %v1811 = vld [vmem:[%s11 + $0x44] sm:$0xf]
  %v1812 = vld [vmem:[%s11 + $0x48] sm:$0xf]
  %v1813 = vld [vmem:[%s11 + $0x4c] sm:$0xf]
  %v1814 = vld [vmem:[%s11 + $0x50] sm:$0xf]
  %v1815 = vld [vmem:[%s11 + $0x54] sm:$0xf]
  %v1816 = vld [vmem:[%s11 + $0x58] sm:$0xf]
  %v1817 = vld [vmem:[%s11 + $0x5c] sm:$0xf]
  %v1818 = vld [vmem:[%s11 + $0x60] sm:$0xf]
  %v1819 = vld [vmem:[%s11 + $0x64] sm:$0xf]
  %v1820 = vld [vmem:[%s11 + $0x68] sm:$0xf]
  %v1821 = vld [vmem:[%s11 + $0x6c] sm:$0xf]
  %v1822 = vld [vmem:[%s11 + $0x70] sm:$0xf]
  %v1823 = vld [vmem:[%s11 + $0x74] sm:$0xf]
  %v1824 = vld [vmem:[%s11 + $0x78] sm:$0xf]
  %v1825 = vld [vmem:[%s11 + $0x7c] sm:$0xf]
  %v1826 = vld [vmem:[%s11 + $0x80] sm:$0xf]
  %v1827 = vld [vmem:[%s11 + $0x84] sm:$0xf]
  %v1828 = vld [vmem:[%s11 + $0x88] sm:$0xf]
  %v1829 = vld [vmem:[%s11 + $0x8c] sm:$0xf]
  %v1830 = vld [vmem:[%s11 + $0x90] sm:$0xf]
  %v1831 = vld [vmem:[%s11 + $0x94] sm:$0xf]
  %v1832 = vld [vmem:[%s11 + $0x98] sm:$0xf]
  %v1833 = vld [vmem:[%s11 + $0x9c] sm:$0xf]
  %v1834 = vld [vmem:[%s11 + $0xa0] sm:$0xf]
  %v1835 = vld [vmem:[%s11 + $0xa4] sm:$0xf]
  %v1836 = vld [vmem:[%s11 + $0xa8] sm:$0xf]
  %v1837 = vld [vmem:[%s11 + $0xac] sm:$0xf]
  %v1838 = vld [vmem:[%s11 + $0xb0] sm:$0xf]
  %v1839 = vld [vmem:[%s11 + $0xb4] sm:$0xf]
  %v1840 = vld [vmem:[%s11 + $0xb8] sm:$0xf]
  %v1841 = vld [vmem:[%s11 + $0xbc] sm:$0xf]
  %v1842 = vld [vmem:[%s12] sm:$0x1]
  %v1844 = vlaneseq
  %v1845 = vshrl.u32 %v1844, 7
  %v1846 = vsub.s32 0, %v1845
  %v1847 = vrot.slane %v1842, %v1846
  %v1897 = vunpack.c.l.b16 %v1794
  %v1898 = vunpack.c.l.b16 %v1795
  %v1899 = vunpack.c.l.b16 %v1796
  %v1900 = vunpack.c.l.b16 %v1797
  %v1901 = vunpack.c.l.b16 %v1798
  %v1902 = vunpack.c.l.b16 %v1799
  %v1903 = vunpack.c.l.b16 %v1800
  %v1904 = vunpack.c.l.b16 %v1801
  %v1905 = vunpack.c.l.b16 %v1802
  %v1906 = vunpack.c.l.b16 %v1803
  %v1907 = vunpack.c.l.b16 %v1804
  %v1908 = vunpack.c.l.b16 %v1805
  %v1909 = vunpack.c.l.b16 %v1806
  %v1910 = vunpack.c.l.b16 %v1807
  %v1911 = vunpack.c.l.b16 %v1808
  %v1912 = vunpack.c.l.b16 %v1809
  %v1913 = vunpack.c.l.b16 %v1810
  %v1914 = vunpack.c.l.b16 %v1811
  %v1915 = vunpack.c.l.b16 %v1812
  %v1916 = vunpack.c.l.b16 %v1813
  %v1917 = vunpack.c.l.b16 %v1814
  %v1918 = vunpack.c.l.b16 %v1815
  %v1919 = vunpack.c.l.b16 %v1816
  %v1920 = vunpack.c.l.b16 %v1817
  %v1921 = vunpack.c.l.b16 %v1818
  %v1922 = vunpack.c.l.b16 %v1819
  %v1923 = vunpack.c.l.b16 %v1820
  %v1924 = vunpack.c.l.b16 %v1821
  %v1925 = vunpack.c.l.b16 %v1822
  %v1926 = vunpack.c.l.b16 %v1823
  %v1927 = vunpack.c.l.b16 %v1824
  %v1928 = vunpack.c.l.b16 %v1825
  %v1929 = vunpack.c.l.b16 %v1826
  %v1930 = vunpack.c.l.b16 %v1827
  %v1931 = vunpack.c.l.b16 %v1828
  %v1932 = vunpack.c.l.b16 %v1829
  %v1933 = vunpack.c.l.b16 %v1830
  %v1934 = vunpack.c.l.b16 %v1831
  %v1935 = vunpack.c.l.b16 %v1832
  %v1936 = vunpack.c.l.b16 %v1833
  %v1937 = vunpack.c.l.b16 %v1834
  %v1938 = vunpack.c.l.b16 %v1835
  %v1939 = vunpack.c.l.b16 %v1836
  %v1940 = vunpack.c.l.b16 %v1837
  %v1941 = vunpack.c.l.b16 %v1838
  %v1942 = vunpack.c.l.b16 %v1839
  %v1943 = vunpack.c.l.b16 %v1840
  %v1944 = vunpack.c.l.b16 %v1841
  %v1945 = vpack.c.b16 %v1898, %v1897
  %v1946 = vpack.c.b16 %v1900, %v1899
  %v1947 = vpack.c.b16 %v1902, %v1901
  %v1948 = vpack.c.b16 %v1904, %v1903
  %v1949 = vpack.c.b16 %v1906, %v1905
  %v1950 = vpack.c.b16 %v1908, %v1907
  %v1951 = vpack.c.b16 %v1910, %v1909
  %v1952 = vpack.c.b16 %v1912, %v1911
  %v1953 = vpack.c.b16 %v1914, %v1913
  %v1954 = vpack.c.b16 %v1916, %v1915
  %v1955 = vpack.c.b16 %v1918, %v1917
  %v1956 = vpack.c.b16 %v1920, %v1919
  %v1957 = vpack.c.b16 %v1922, %v1921
  %v1958 = vpack.c.b16 %v1924, %v1923
  %v1959 = vpack.c.b16 %v1926, %v1925
  %v1960 = vpack.c.b16 %v1928, %v1927
  %v1961 = vpack.c.b16 %v1930, %v1929
  %v1962 = vpack.c.b16 %v1932, %v1931
  %v1963 = vpack.c.b16 %v1934, %v1933
  %v1964 = vpack.c.b16 %v1936, %v1935
  %v1965 = vpack.c.b16 %v1938, %v1937
  %v1966 = vpack.c.b16 %v1940, %v1939
  %v1967 = vpack.c.b16 %v1942, %v1941
  %v1968 = vpack.c.b16 %v1944, %v1943
  %1993 = vmatprep.subr.bf16.mxu0 0
  %1994 = vmatpush1.bf16.msra.mxu0 %v1945
  %1995 = vmatprep.subr.bf16.mxu0 0
  %1996 = vmatpush1.bf16.msra.mxu0 %v1946
  %1997 = vmatprep.subr.bf16.mxu0 0
  %1998 = vmatpush1.bf16.msra.mxu0 %v1947
  %1999 = vmatprep.subr.bf16.mxu0 0
  %2000 = vmatpush1.bf16.msra.mxu0 %v1948
  %2001 = vmatprep.subr.bf16.mxu0 0
  %2002 = vmatpush1.bf16.msra.mxu0 %v1949
  %2003 = vmatprep.subr.bf16.mxu0 0
  %2004 = vmatpush1.bf16.msra.mxu0 %v1950
  %2005 = vmatprep.subr.bf16.mxu0 0
  %2006 = vmatpush1.bf16.msra.mxu0 %v1951
  %2007 = vmatprep.subr.bf16.mxu0 0
  %2008 = vmatpush1.bf16.msra.mxu0 %v1952
  %2009 = vmatprep.subr.bf16.mxu0 0
  %2010 = vmatpush1.bf16.msra.mxu0 %v1953
  %2011 = vmatprep.subr.bf16.mxu0 0
  %2012 = vmatpush1.bf16.msra.mxu0 %v1954
  %2013 = vmatprep.subr.bf16.mxu0 0
  %2014 = vmatpush1.bf16.msra.mxu0 %v1955
  %2015 = vmatprep.subr.bf16.mxu0 0
  %2016 = vmatpush1.bf16.msra.mxu0 %v1956
  %2017 = vmatprep.subr.bf16.mxu0 0
  %2018 = vmatpush1.bf16.msra.mxu0 %v1957
  %2019 = vmatprep.subr.bf16.mxu0 0
  %2020 = vmatpush1.bf16.msra.mxu0 %v1958
  %2021 = vmatprep.subr.bf16.mxu0 0
  %2022 = vmatpush1.bf16.msra.mxu0 %v1959
  %2023 = vmatprep.subr.bf16.mxu0 0
  %2024 = vmatpush1.bf16.msra.mxu0 %v1960
  %2025 = vmatprep.mubr.bf16.mxu0 %v1792
  %2026 = vmatmul.mubr.bf16.gmra.mrb[0].mxu0 %v1791
  %v2027 = vpop.f32.mrb[0].mxu0
  %v2028 = vadd.f32 %v1847, %v2027
  %v2029 = vpop.f32.mrb[0].mxu0
  %v2030 = vpop.f32.mrb[0].mxu0
  %v2031 = vadd.f32 %v1847, %v2030
  %v2032 = vpop.f32.mrb[0].mxu0
  %2033 = vdwg.mxu0
  %2034 = vmatprep.subr.bf16.mxu0 0
  %2035 = vmatpush1.bf16.msra.mxu0 %v1961
  %2036 = vmatprep.subr.bf16.mxu0 0
  %2037 = vmatpush1.bf16.msra.mxu0 %v1962
  %2038 = vmatprep.subr.bf16.mxu0 0
  %2039 = vmatpush1.bf16.msra.mxu0 %v1963
  %2040 = vmatprep.subr.bf16.mxu0 0
  %2041 = vmatpush1.bf16.msra.mxu0 %v1964
  %2042 = vmatprep.subr.bf16.mxu0 0
  %2043 = vmatpush1.bf16.msra.mxu0 %v1965
  %2044 = vmatprep.subr.bf16.mxu0 0
  %2045 = vmatpush1.bf16.msra.mxu0 %v1966
  %2046 = vmatprep.subr.bf16.mxu0 0
  %2047 = vmatpush1.bf16.msra.mxu0 %v1967
  %2048 = vmatprep.subr.bf16.mxu0 0
  %2049 = vmatpush1.bf16.msra.mxu0 %v1968
  %2050 = vmatprep.subr.bf16.mxu0 0
  %2051 = vmatpush1.bf16.msra.mxu0 0
  %2052 = vmatprep.subr.bf16.mxu0 0
  %2053 = vmatpush1.bf16.msra.mxu0 0
  %2054 = vmatprep.subr.bf16.mxu0 0
  %2055 = vmatpush1.bf16.msra.mxu0 0
  %2056 = vmatprep.subr.bf16.mxu0 0
  %2057 = vmatpush1.bf16.msra.mxu0 0
  %2058 = vmatprep.subr.bf16.mxu0 0
  %2059 = vmatpush1.bf16.msra.mxu0 0
  %2060 = vmatprep.subr.bf16.mxu0 0
  %2061 = vmatpush1.bf16.msra.mxu0 0
  %2062 = vmatprep.subr.bf16.mxu0 0
  %2063 = vmatpush1.bf16.msra.mxu0 0
  %2064 = vmatprep.subr.bf16.mxu0 0
  %2065 = vmatpush1.bf16.msra.mxu0 0
  %2066 = vmatprep.mubr.bf16.mxu0 0
  %2067 = vmatmul.mubr.bf16.gmra.mrb[0].mxu0 %v1793
  %v2068 = vpop.f32.mrb[0].mxu0
  %v2069 = vadd.f32 %v2028, %v2068
  %v2070 = vpop.f32.mrb[0].mxu0
  %v2071 = vpop.f32.mrb[0].mxu0
  %v2072 = vadd.f32 %v2031, %v2071
  %v2073 = vpop.f32.mrb[0].mxu0
  %2074 = vdwg.mxu0
  %v2075 = vtanh.pop %v2069
  %v2076 = vtanh.pop %v2072
  %v2077 = vpack.c.bf16 %v2076, %v2075
  %v2079 = vunpack.c.l.b16 %v2077
  %v2080 = vunpack.c.h.b16 %v2077
  %v2081 = vpack.c.b16 %v2079, %v2079
  %v2082 = vpack.c.b16 %v2080, %v2080
  %2085 = vst [vmem:[%s13] sm:$0xf] %v2081
  %2086 = vst [vmem:[%s13 + $0x4] sm:$0xf] %v2082
  // Predicated region
  $region54: #{_lambda_.1} parent=0 // pred_check
    _
  $region55: #{_lambda_.1} parent=0 // pred_check_branch
    %2088 = sbr.rel (0) target = $region57
  $region56: #{_lambda_.1} parent=0 // pred_region
    _
  $region57: #{_lambda_.1} parent=0 // pred_fallthru
    _
  // Predicated region
  $region58: #{_lambda_.1} parent=0 // pred_check
    _
  $region59: #{_lambda_.1} parent=0 // pred_check_branch
    %2090 = sbr.rel (0) target = $region61
  $region60: #{_lambda_.1} parent=0 // pred_region
    _
  $region61: #{_lambda_.1} parent=0 // pred_fallthru
    _

</llo_original>
